<compile_context>
chip_gen: v7x
topology: tpu7x:2x2x1
jax: 0.10.0
libtpu: 0.0.40
codegen_flags: <defaults>
</compile_context>

<pallas_src>
import functools

import jax
import jax.numpy as jnp
from jax.experimental import pallas as pl
from jax.experimental.pallas import tpu as pltpu


def _conv2d_stencil_kernel(w_ref, b_ref, x_ref, o_ref, *, N, Cin, Cout, K, H, W):
    """VPU stencil conv.

    w_ref: SMEM (Cout*Cin*K*K,) f32   -- flat OIHW weights (scalar reads)
    b_ref: SMEM (Cout,)         f32
    x_ref: VMEM (N, Cin, H*W + (K-1)*(W+1)) f32  -- flattened + zero-padded input
    o_ref: VMEM (N, Cout, H*W)  f32   -- "shifted-frame" output slab, lane-dense
    """
    HW = H * W
    x = x_ref[...]  # (N, Cin, HW + pad)

    # One accumulator slab per output channel, initialized with the bias.
    accs = [jnp.full((N, HW), b_ref[co], dtype=jnp.float32) for co in range(Cout)]

    # 27 lane-window taps, 81 scalar-broadcast FMAs on (N, HW) slabs (all VPU, exact f32).
    for ci in range(Cin):
        for kh in range(K):
            for kw in range(K):
                s = kh * W + kw
                xs = x[:, ci, s:s + HW]  # (N, HW): x shifted by the tap offset
                for co in range(Cout):
                    wv = w_ref[((co * Cin + ci) * K + kh) * K + kw]
                    accs[co] = accs[co] + wv * xs

    out = jnp.stack(accs, axis=1)            # (N, Cout, HW)
    o_ref[...] = out.astype(o_ref.dtype)     # single lane-dense store (HW = 2*128)


@jax.jit
def conv2d_pallas(x_nchw, w_oihw, bias):
    """Valid (no padding), stride-1 2D convolution matching torch.nn.Conv2d(3, 3, 3).

    Args:
      x_nchw: (N, Cin, H, W) float32
      w_oihw: (Cout, Cin, K, K) float32   (PyTorch weight layout)
      bias:   (Cout,) float32
    Returns:
      (N, Cout, Ho, Wo) float32 with Ho = H - K + 1, Wo = W - K + 1
    """
    N, Cin, H, W = x_nchw.shape
    Cout, Cin_w, K, K2 = w_oihw.shape
    assert Cin == Cin_w and K == K2
    Ho, Wo = H - K + 1, W - K + 1
    HW = H * W
    pad = (K - 1) * (W + 1)  # max tap offset, so every tap is an in-bounds lane window

    # Layout plumbing only (no transposes): flatten spatial onto the lane axis and
    # zero-pad the tail; flatten parameters for SMEM. All fused by jit.
    x_flat = x_nchw.reshape(N, Cin, HW)
    x_pad = jnp.pad(x_flat, ((0, 0), (0, 0), (0, pad)))
    w_flat = w_oihw.reshape(-1)

    kernel = functools.partial(
        _conv2d_stencil_kernel, N=N, Cin=Cin, Cout=Cout, K=K, H=H, W=W
    )

    out_slab = pl.pallas_call(
        kernel,
        out_shape=jax.ShapeDtypeStruct((N, Cout, HW), x_nchw.dtype),
        in_specs=[
            pl.BlockSpec(memory_space=pltpu.MemorySpace.SMEM),  # weights (scalars)
            pl.BlockSpec(memory_space=pltpu.MemorySpace.SMEM),  # bias (scalars)
            pl.BlockSpec(memory_space=pltpu.MemorySpace.VMEM),  # input slab
        ],
        out_specs=pl.BlockSpec(memory_space=pltpu.MemorySpace.VMEM),
    )(w_flat, bias, x_pad)

    # out_slab[n, co, i*W + j] == conv output at (i, j) for i < Ho, j < Wo.
    out_full = out_slab.reshape(N, Cout, H, W)
    return out_full[:, :, :Ho, :Wo]


def _reference_conv(x_nchw, w_oihw, bias):
    # Pure-JAX reference for correctness checking (exact precision).
    y = jax.lax.conv_general_dilated(
        x_nchw, w_oihw,
        window_strides=(1, 1), padding="VALID",
        dimension_numbers=("NCHW", "OIHW", "NCHW"),
        precision=jax.lax.Precision.HIGHEST,
    )
    return y + bias.reshape(1, -1, 1, 1)


if __name__ == "__main__":
    key = jax.random.PRNGKey(0)
    kx, kw, kb = jax.random.split(key, 3)

    # Small shapes consistent with Conv2d(3, 3, 3): batch=2, Cin=3, H=W=16.
    N, Cin, Cout, K, H, W = 2, 3, 3, 3, 16, 16

    x = jax.random.normal(kx, (N, Cin, H, W), dtype=jnp.float32)
    # Deterministic parameter init (PyTorch-like uniform fan-in bound).
    fan_in = Cin * K * K
    bound = 1.0 / (fan_in ** 0.5)
    weight = jax.random.uniform(kw, (Cout, Cin, K, K), jnp.float32, -bound, bound)
    bias = jax.random.uniform(kb, (Cout,), jnp.float32, -bound, bound)

    out = conv2d_pallas(x, weight, bias)
    out = jax.block_until_ready(out)

    ref = jax.block_until_ready(_reference_conv(x, weight, bias))
    assert out.shape == (N, Cout, H - K + 1, W - K + 1)
    assert jnp.allclose(out, ref, atol=1e-5, rtol=1e-5)

    # TODO(synk): torch.onnx.is_in_onnx_export() clip branch is export-time-only and
    # not executed in the eager forward, so it is intentionally not implemented.
    print("KERNEL_OK")
</pallas_src>

<mosaic_0001>
module attributes {stable_mosaic.version = 11 : i64} {
  func.func @_conv2d_stencil_kernel(%arg0: memref<81xf32, #tpu.memory_space<smem>>, %arg1: memref<3xf32, #tpu.memory_space<smem>>, %arg2: memref<2x3x290xf32, #tpu.memory_space<vmem>>, %arg3: memref<2x3x256xf32, #tpu.memory_space<vmem>>) attributes {dimension_semantics = [], scalar_prefetch = 0 : i64, scratch_operands = 0 : i64, tpu.core_type = #tpu.core_type<tc>} {
    %c0 = arith.constant 0 : index
    %c0_0 = arith.constant 0 : index
    %c0_1 = arith.constant 0 : index
    %0 = vector.load %arg2[%c0, %c0_0, %c0_1] : memref<2x3x290xf32, #tpu.memory_space<vmem>>, vector<2x3x290xf32>
    %c0_2 = arith.constant 0 : index
    %1 = memref.load %arg1[%c0_2] : memref<3xf32, #tpu.memory_space<smem>>
    %2 = vector.broadcast %1 : f32 to vector<2x256xf32>
    %c1 = arith.constant 1 : index
    %3 = memref.load %arg1[%c1] : memref<3xf32, #tpu.memory_space<smem>>
    %4 = vector.broadcast %3 : f32 to vector<2x256xf32>
    %c2 = arith.constant 2 : index
    %5 = memref.load %arg1[%c2] : memref<3xf32, #tpu.memory_space<smem>>
    %6 = vector.broadcast %5 : f32 to vector<2x256xf32>
    %7 = vector.extract_strided_slice %0 {offsets = [0, 0, 0], sizes = [2, 1, 256], strides = [1, 1, 1]} : vector<2x3x290xf32> to vector<2x1x256xf32>
    %8 = vector.shape_cast %7 : vector<2x1x256xf32> to vector<2x256xf32>
    %c0_3 = arith.constant 0 : index
    %9 = memref.load %arg0[%c0_3] : memref<81xf32, #tpu.memory_space<smem>>
    %10 = vector.broadcast %9 : f32 to vector<2x256xf32>
    %11 = arith.mulf %10, %8 : vector<2x256xf32>
    %12 = arith.addf %2, %11 : vector<2x256xf32>
    %c27 = arith.constant 27 : index
    %13 = memref.load %arg0[%c27] : memref<81xf32, #tpu.memory_space<smem>>
    %14 = vector.broadcast %13 : f32 to vector<2x256xf32>
    %15 = arith.mulf %14, %8 : vector<2x256xf32>
    %16 = arith.addf %4, %15 : vector<2x256xf32>
    %c54 = arith.constant 54 : index
    %17 = memref.load %arg0[%c54] : memref<81xf32, #tpu.memory_space<smem>>
    %18 = vector.broadcast %17 : f32 to vector<2x256xf32>
    %19 = arith.mulf %18, %8 : vector<2x256xf32>
    %20 = arith.addf %6, %19 : vector<2x256xf32>
    %21 = vector.extract_strided_slice %0 {offsets = [0, 0, 1], sizes = [2, 1, 256], strides = [1, 1, 1]} : vector<2x3x290xf32> to vector<2x1x256xf32>
    %22 = vector.shape_cast %21 : vector<2x1x256xf32> to vector<2x256xf32>
    %c1_4 = arith.constant 1 : index
    %23 = memref.load %arg0[%c1_4] : memref<81xf32, #tpu.memory_space<smem>>
    %24 = vector.broadcast %23 : f32 to vector<2x256xf32>
    %25 = arith.mulf %24, %22 : vector<2x256xf32>
    %26 = arith.addf %12, %25 : vector<2x256xf32>
    %c28 = arith.constant 28 : index
    %27 = memref.load %arg0[%c28] : memref<81xf32, #tpu.memory_space<smem>>
    %28 = vector.broadcast %27 : f32 to vector<2x256xf32>
    %29 = arith.mulf %28, %22 : vector<2x256xf32>
    %30 = arith.addf %16, %29 : vector<2x256xf32>
    %c55 = arith.constant 55 : index
    %31 = memref.load %arg0[%c55] : memref<81xf32, #tpu.memory_space<smem>>
    %32 = vector.broadcast %31 : f32 to vector<2x256xf32>
    %33 = arith.mulf %32, %22 : vector<2x256xf32>
    %34 = arith.addf %20, %33 : vector<2x256xf32>
    %35 = vector.extract_strided_slice %0 {offsets = [0, 0, 2], sizes = [2, 1, 256], strides = [1, 1, 1]} : vector<2x3x290xf32> to vector<2x1x256xf32>
    %36 = vector.shape_cast %35 : vector<2x1x256xf32> to vector<2x256xf32>
    %c2_5 = arith.constant 2 : index
    %37 = memref.load %arg0[%c2_5] : memref<81xf32, #tpu.memory_space<smem>>
    %38 = vector.broadcast %37 : f32 to vector<2x256xf32>
    %39 = arith.mulf %38, %36 : vector<2x256xf32>
    %40 = arith.addf %26, %39 : vector<2x256xf32>
    %c29 = arith.constant 29 : index
    %41 = memref.load %arg0[%c29] : memref<81xf32, #tpu.memory_space<smem>>
    %42 = vector.broadcast %41 : f32 to vector<2x256xf32>
    %43 = arith.mulf %42, %36 : vector<2x256xf32>
    %44 = arith.addf %30, %43 : vector<2x256xf32>
    %c56 = arith.constant 56 : index
    %45 = memref.load %arg0[%c56] : memref<81xf32, #tpu.memory_space<smem>>
    %46 = vector.broadcast %45 : f32 to vector<2x256xf32>
    %47 = arith.mulf %46, %36 : vector<2x256xf32>
    %48 = arith.addf %34, %47 : vector<2x256xf32>
    %49 = vector.extract_strided_slice %0 {offsets = [0, 0, 16], sizes = [2, 1, 256], strides = [1, 1, 1]} : vector<2x3x290xf32> to vector<2x1x256xf32>
    %50 = vector.shape_cast %49 : vector<2x1x256xf32> to vector<2x256xf32>
    %c3 = arith.constant 3 : index
    %51 = memref.load %arg0[%c3] : memref<81xf32, #tpu.memory_space<smem>>
    %52 = vector.broadcast %51 : f32 to vector<2x256xf32>
    %53 = arith.mulf %52, %50 : vector<2x256xf32>
    %54 = arith.addf %40, %53 : vector<2x256xf32>
    %c30 = arith.constant 30 : index
    %55 = memref.load %arg0[%c30] : memref<81xf32, #tpu.memory_space<smem>>
    %56 = vector.broadcast %55 : f32 to vector<2x256xf32>
    %57 = arith.mulf %56, %50 : vector<2x256xf32>
    %58 = arith.addf %44, %57 : vector<2x256xf32>
    %c57 = arith.constant 57 : index
    %59 = memref.load %arg0[%c57] : memref<81xf32, #tpu.memory_space<smem>>
    %60 = vector.broadcast %59 : f32 to vector<2x256xf32>
    %61 = arith.mulf %60, %50 : vector<2x256xf32>
    %62 = arith.addf %48, %61 : vector<2x256xf32>
    %63 = vector.extract_strided_slice %0 {offsets = [0, 0, 17], sizes = [2, 1, 256], strides = [1, 1, 1]} : vector<2x3x290xf32> to vector<2x1x256xf32>
    %64 = vector.shape_cast %63 : vector<2x1x256xf32> to vector<2x256xf32>
    %c4 = arith.constant 4 : index
    %65 = memref.load %arg0[%c4] : memref<81xf32, #tpu.memory_space<smem>>
    %66 = vector.broadcast %65 : f32 to vector<2x256xf32>
    %67 = arith.mulf %66, %64 : vector<2x256xf32>
    %68 = arith.addf %54, %67 : vector<2x256xf32>
    %c31 = arith.constant 31 : index
    %69 = memref.load %arg0[%c31] : memref<81xf32, #tpu.memory_space<smem>>
    %70 = vector.broadcast %69 : f32 to vector<2x256xf32>
    %71 = arith.mulf %70, %64 : vector<2x256xf32>
    %72 = arith.addf %58, %71 : vector<2x256xf32>
    %c58 = arith.constant 58 : index
    %73 = memref.load %arg0[%c58] : memref<81xf32, #tpu.memory_space<smem>>
    %74 = vector.broadcast %73 : f32 to vector<2x256xf32>
    %75 = arith.mulf %74, %64 : vector<2x256xf32>
    %76 = arith.addf %62, %75 : vector<2x256xf32>
    %77 = vector.extract_strided_slice %0 {offsets = [0, 0, 18], sizes = [2, 1, 256], strides = [1, 1, 1]} : vector<2x3x290xf32> to vector<2x1x256xf32>
    %78 = vector.shape_cast %77 : vector<2x1x256xf32> to vector<2x256xf32>
    %c5 = arith.constant 5 : index
    %79 = memref.load %arg0[%c5] : memref<81xf32, #tpu.memory_space<smem>>
    %80 = vector.broadcast %79 : f32 to vector<2x256xf32>
    %81 = arith.mulf %80, %78 : vector<2x256xf32>
    %82 = arith.addf %68, %81 : vector<2x256xf32>
    %c32 = arith.constant 32 : index
    %83 = memref.load %arg0[%c32] : memref<81xf32, #tpu.memory_space<smem>>
    %84 = vector.broadcast %83 : f32 to vector<2x256xf32>
    %85 = arith.mulf %84, %78 : vector<2x256xf32>
    %86 = arith.addf %72, %85 : vector<2x256xf32>
    %c59 = arith.constant 59 : index
    %87 = memref.load %arg0[%c59] : memref<81xf32, #tpu.memory_space<smem>>
    %88 = vector.broadcast %87 : f32 to vector<2x256xf32>
    %89 = arith.mulf %88, %78 : vector<2x256xf32>
    %90 = arith.addf %76, %89 : vector<2x256xf32>
    %91 = vector.extract_strided_slice %0 {offsets = [0, 0, 32], sizes = [2, 1, 256], strides = [1, 1, 1]} : vector<2x3x290xf32> to vector<2x1x256xf32>
    %92 = vector.shape_cast %91 : vector<2x1x256xf32> to vector<2x256xf32>
    %c6 = arith.constant 6 : index
    %93 = memref.load %arg0[%c6] : memref<81xf32, #tpu.memory_space<smem>>
    %94 = vector.broadcast %93 : f32 to vector<2x256xf32>
    %95 = arith.mulf %94, %92 : vector<2x256xf32>
    %96 = arith.addf %82, %95 : vector<2x256xf32>
    %c33 = arith.constant 33 : index
    %97 = memref.load %arg0[%c33] : memref<81xf32, #tpu.memory_space<smem>>
    %98 = vector.broadcast %97 : f32 to vector<2x256xf32>
    %99 = arith.mulf %98, %92 : vector<2x256xf32>
    %100 = arith.addf %86, %99 : vector<2x256xf32>
    %c60 = arith.constant 60 : index
    %101 = memref.load %arg0[%c60] : memref<81xf32, #tpu.memory_space<smem>>
    %102 = vector.broadcast %101 : f32 to vector<2x256xf32>
    %103 = arith.mulf %102, %92 : vector<2x256xf32>
    %104 = arith.addf %90, %103 : vector<2x256xf32>
    %105 = vector.extract_strided_slice %0 {offsets = [0, 0, 33], sizes = [2, 1, 256], strides = [1, 1, 1]} : vector<2x3x290xf32> to vector<2x1x256xf32>
    %106 = vector.shape_cast %105 : vector<2x1x256xf32> to vector<2x256xf32>
    %c7 = arith.constant 7 : index
    %107 = memref.load %arg0[%c7] : memref<81xf32, #tpu.memory_space<smem>>
    %108 = vector.broadcast %107 : f32 to vector<2x256xf32>
    %109 = arith.mulf %108, %106 : vector<2x256xf32>
    %110 = arith.addf %96, %109 : vector<2x256xf32>
    %c34 = arith.constant 34 : index
    %111 = memref.load %arg0[%c34] : memref<81xf32, #tpu.memory_space<smem>>
    %112 = vector.broadcast %111 : f32 to vector<2x256xf32>
    %113 = arith.mulf %112, %106 : vector<2x256xf32>
    %114 = arith.addf %100, %113 : vector<2x256xf32>
    %c61 = arith.constant 61 : index
    %115 = memref.load %arg0[%c61] : memref<81xf32, #tpu.memory_space<smem>>
    %116 = vector.broadcast %115 : f32 to vector<2x256xf32>
    %117 = arith.mulf %116, %106 : vector<2x256xf32>
    %118 = arith.addf %104, %117 : vector<2x256xf32>
    %119 = vector.extract_strided_slice %0 {offsets = [0, 0, 34], sizes = [2, 1, 256], strides = [1, 1, 1]} : vector<2x3x290xf32> to vector<2x1x256xf32>
    %120 = vector.shape_cast %119 : vector<2x1x256xf32> to vector<2x256xf32>
    %c8 = arith.constant 8 : index
    %121 = memref.load %arg0[%c8] : memref<81xf32, #tpu.memory_space<smem>>
    %122 = vector.broadcast %121 : f32 to vector<2x256xf32>
    %123 = arith.mulf %122, %120 : vector<2x256xf32>
    %124 = arith.addf %110, %123 : vector<2x256xf32>
    %c35 = arith.constant 35 : index
    %125 = memref.load %arg0[%c35] : memref<81xf32, #tpu.memory_space<smem>>
    %126 = vector.broadcast %125 : f32 to vector<2x256xf32>
    %127 = arith.mulf %126, %120 : vector<2x256xf32>
    %128 = arith.addf %114, %127 : vector<2x256xf32>
    %c62 = arith.constant 62 : index
    %129 = memref.load %arg0[%c62] : memref<81xf32, #tpu.memory_space<smem>>
    %130 = vector.broadcast %129 : f32 to vector<2x256xf32>
    %131 = arith.mulf %130, %120 : vector<2x256xf32>
    %132 = arith.addf %118, %131 : vector<2x256xf32>
    %133 = vector.extract_strided_slice %0 {offsets = [0, 1, 0], sizes = [2, 1, 256], strides = [1, 1, 1]} : vector<2x3x290xf32> to vector<2x1x256xf32>
    %134 = vector.shape_cast %133 : vector<2x1x256xf32> to vector<2x256xf32>
    %c9 = arith.constant 9 : index
    %135 = memref.load %arg0[%c9] : memref<81xf32, #tpu.memory_space<smem>>
    %136 = vector.broadcast %135 : f32 to vector<2x256xf32>
    %137 = arith.mulf %136, %134 : vector<2x256xf32>
    %138 = arith.addf %124, %137 : vector<2x256xf32>
    %c36 = arith.constant 36 : index
    %139 = memref.load %arg0[%c36] : memref<81xf32, #tpu.memory_space<smem>>
    %140 = vector.broadcast %139 : f32 to vector<2x256xf32>
    %141 = arith.mulf %140, %134 : vector<2x256xf32>
    %142 = arith.addf %128, %141 : vector<2x256xf32>
    %c63 = arith.constant 63 : index
    %143 = memref.load %arg0[%c63] : memref<81xf32, #tpu.memory_space<smem>>
    %144 = vector.broadcast %143 : f32 to vector<2x256xf32>
    %145 = arith.mulf %144, %134 : vector<2x256xf32>
    %146 = arith.addf %132, %145 : vector<2x256xf32>
    %147 = vector.extract_strided_slice %0 {offsets = [0, 1, 1], sizes = [2, 1, 256], strides = [1, 1, 1]} : vector<2x3x290xf32> to vector<2x1x256xf32>
    %148 = vector.shape_cast %147 : vector<2x1x256xf32> to vector<2x256xf32>
    %c10 = arith.constant 10 : index
    %149 = memref.load %arg0[%c10] : memref<81xf32, #tpu.memory_space<smem>>
    %150 = vector.broadcast %149 : f32 to vector<2x256xf32>
    %151 = arith.mulf %150, %148 : vector<2x256xf32>
    %152 = arith.addf %138, %151 : vector<2x256xf32>
    %c37 = arith.constant 37 : index
    %153 = memref.load %arg0[%c37] : memref<81xf32, #tpu.memory_space<smem>>
    %154 = vector.broadcast %153 : f32 to vector<2x256xf32>
    %155 = arith.mulf %154, %148 : vector<2x256xf32>
    %156 = arith.addf %142, %155 : vector<2x256xf32>
    %c64 = arith.constant 64 : index
    %157 = memref.load %arg0[%c64] : memref<81xf32, #tpu.memory_space<smem>>
    %158 = vector.broadcast %157 : f32 to vector<2x256xf32>
    %159 = arith.mulf %158, %148 : vector<2x256xf32>
    %160 = arith.addf %146, %159 : vector<2x256xf32>
    %161 = vector.extract_strided_slice %0 {offsets = [0, 1, 2], sizes = [2, 1, 256], strides = [1, 1, 1]} : vector<2x3x290xf32> to vector<2x1x256xf32>
    %162 = vector.shape_cast %161 : vector<2x1x256xf32> to vector<2x256xf32>
    %c11 = arith.constant 11 : index
    %163 = memref.load %arg0[%c11] : memref<81xf32, #tpu.memory_space<smem>>
    %164 = vector.broadcast %163 : f32 to vector<2x256xf32>
    %165 = arith.mulf %164, %162 : vector<2x256xf32>
    %166 = arith.addf %152, %165 : vector<2x256xf32>
    %c38 = arith.constant 38 : index
    %167 = memref.load %arg0[%c38] : memref<81xf32, #tpu.memory_space<smem>>
    %168 = vector.broadcast %167 : f32 to vector<2x256xf32>
    %169 = arith.mulf %168, %162 : vector<2x256xf32>
    %170 = arith.addf %156, %169 : vector<2x256xf32>
    %c65 = arith.constant 65 : index
    %171 = memref.load %arg0[%c65] : memref<81xf32, #tpu.memory_space<smem>>
    %172 = vector.broadcast %171 : f32 to vector<2x256xf32>
    %173 = arith.mulf %172, %162 : vector<2x256xf32>
    %174 = arith.addf %160, %173 : vector<2x256xf32>
    %175 = vector.extract_strided_slice %0 {offsets = [0, 1, 16], sizes = [2, 1, 256], strides = [1, 1, 1]} : vector<2x3x290xf32> to vector<2x1x256xf32>
    %176 = vector.shape_cast %175 : vector<2x1x256xf32> to vector<2x256xf32>
    %c12 = arith.constant 12 : index
    %177 = memref.load %arg0[%c12] : memref<81xf32, #tpu.memory_space<smem>>
    %178 = vector.broadcast %177 : f32 to vector<2x256xf32>
    %179 = arith.mulf %178, %176 : vector<2x256xf32>
    %180 = arith.addf %166, %179 : vector<2x256xf32>
    %c39 = arith.constant 39 : index
    %181 = memref.load %arg0[%c39] : memref<81xf32, #tpu.memory_space<smem>>
    %182 = vector.broadcast %181 : f32 to vector<2x256xf32>
    %183 = arith.mulf %182, %176 : vector<2x256xf32>
    %184 = arith.addf %170, %183 : vector<2x256xf32>
    %c66 = arith.constant 66 : index
    %185 = memref.load %arg0[%c66] : memref<81xf32, #tpu.memory_space<smem>>
    %186 = vector.broadcast %185 : f32 to vector<2x256xf32>
    %187 = arith.mulf %186, %176 : vector<2x256xf32>
    %188 = arith.addf %174, %187 : vector<2x256xf32>
    %189 = vector.extract_strided_slice %0 {offsets = [0, 1, 17], sizes = [2, 1, 256], strides = [1, 1, 1]} : vector<2x3x290xf32> to vector<2x1x256xf32>
    %190 = vector.shape_cast %189 : vector<2x1x256xf32> to vector<2x256xf32>
    %c13 = arith.constant 13 : index
    %191 = memref.load %arg0[%c13] : memref<81xf32, #tpu.memory_space<smem>>
    %192 = vector.broadcast %191 : f32 to vector<2x256xf32>
    %193 = arith.mulf %192, %190 : vector<2x256xf32>
    %194 = arith.addf %180, %193 : vector<2x256xf32>
    %c40 = arith.constant 40 : index
    %195 = memref.load %arg0[%c40] : memref<81xf32, #tpu.memory_space<smem>>
    %196 = vector.broadcast %195 : f32 to vector<2x256xf32>
    %197 = arith.mulf %196, %190 : vector<2x256xf32>
    %198 = arith.addf %184, %197 : vector<2x256xf32>
    %c67 = arith.constant 67 : index
    %199 = memref.load %arg0[%c67] : memref<81xf32, #tpu.memory_space<smem>>
    %200 = vector.broadcast %199 : f32 to vector<2x256xf32>
    %201 = arith.mulf %200, %190 : vector<2x256xf32>
    %202 = arith.addf %188, %201 : vector<2x256xf32>
    %203 = vector.extract_strided_slice %0 {offsets = [0, 1, 18], sizes = [2, 1, 256], strides = [1, 1, 1]} : vector<2x3x290xf32> to vector<2x1x256xf32>
    %204 = vector.shape_cast %203 : vector<2x1x256xf32> to vector<2x256xf32>
    %c14 = arith.constant 14 : index
    %205 = memref.load %arg0[%c14] : memref<81xf32, #tpu.memory_space<smem>>
    %206 = vector.broadcast %205 : f32 to vector<2x256xf32>
    %207 = arith.mulf %206, %204 : vector<2x256xf32>
    %208 = arith.addf %194, %207 : vector<2x256xf32>
    %c41 = arith.constant 41 : index
    %209 = memref.load %arg0[%c41] : memref<81xf32, #tpu.memory_space<smem>>
    %210 = vector.broadcast %209 : f32 to vector<2x256xf32>
    %211 = arith.mulf %210, %204 : vector<2x256xf32>
    %212 = arith.addf %198, %211 : vector<2x256xf32>
    %c68 = arith.constant 68 : index
    %213 = memref.load %arg0[%c68] : memref<81xf32, #tpu.memory_space<smem>>
    %214 = vector.broadcast %213 : f32 to vector<2x256xf32>
    %215 = arith.mulf %214, %204 : vector<2x256xf32>
    %216 = arith.addf %202, %215 : vector<2x256xf32>
    %217 = vector.extract_strided_slice %0 {offsets = [0, 1, 32], sizes = [2, 1, 256], strides = [1, 1, 1]} : vector<2x3x290xf32> to vector<2x1x256xf32>
    %218 = vector.shape_cast %217 : vector<2x1x256xf32> to vector<2x256xf32>
    %c15 = arith.constant 15 : index
    %219 = memref.load %arg0[%c15] : memref<81xf32, #tpu.memory_space<smem>>
    %220 = vector.broadcast %219 : f32 to vector<2x256xf32>
    %221 = arith.mulf %220, %218 : vector<2x256xf32>
    %222 = arith.addf %208, %221 : vector<2x256xf32>
    %c42 = arith.constant 42 : index
    %223 = memref.load %arg0[%c42] : memref<81xf32, #tpu.memory_space<smem>>
    %224 = vector.broadcast %223 : f32 to vector<2x256xf32>
    %225 = arith.mulf %224, %218 : vector<2x256xf32>
    %226 = arith.addf %212, %225 : vector<2x256xf32>
    %c69 = arith.constant 69 : index
    %227 = memref.load %arg0[%c69] : memref<81xf32, #tpu.memory_space<smem>>
    %228 = vector.broadcast %227 : f32 to vector<2x256xf32>
    %229 = arith.mulf %228, %218 : vector<2x256xf32>
    %230 = arith.addf %216, %229 : vector<2x256xf32>
    %231 = vector.extract_strided_slice %0 {offsets = [0, 1, 33], sizes = [2, 1, 256], strides = [1, 1, 1]} : vector<2x3x290xf32> to vector<2x1x256xf32>
    %232 = vector.shape_cast %231 : vector<2x1x256xf32> to vector<2x256xf32>
    %c16 = arith.constant 16 : index
    %233 = memref.load %arg0[%c16] : memref<81xf32, #tpu.memory_space<smem>>
    %234 = vector.broadcast %233 : f32 to vector<2x256xf32>
    %235 = arith.mulf %234, %232 : vector<2x256xf32>
    %236 = arith.addf %222, %235 : vector<2x256xf32>
    %c43 = arith.constant 43 : index
    %237 = memref.load %arg0[%c43] : memref<81xf32, #tpu.memory_space<smem>>
    %238 = vector.broadcast %237 : f32 to vector<2x256xf32>
    %239 = arith.mulf %238, %232 : vector<2x256xf32>
    %240 = arith.addf %226, %239 : vector<2x256xf32>
    %c70 = arith.constant 70 : index
    %241 = memref.load %arg0[%c70] : memref<81xf32, #tpu.memory_space<smem>>
    %242 = vector.broadcast %241 : f32 to vector<2x256xf32>
    %243 = arith.mulf %242, %232 : vector<2x256xf32>
    %244 = arith.addf %230, %243 : vector<2x256xf32>
    %245 = vector.extract_strided_slice %0 {offsets = [0, 1, 34], sizes = [2, 1, 256], strides = [1, 1, 1]} : vector<2x3x290xf32> to vector<2x1x256xf32>
    %246 = vector.shape_cast %245 : vector<2x1x256xf32> to vector<2x256xf32>
    %c17 = arith.constant 17 : index
    %247 = memref.load %arg0[%c17] : memref<81xf32, #tpu.memory_space<smem>>
    %248 = vector.broadcast %247 : f32 to vector<2x256xf32>
    %249 = arith.mulf %248, %246 : vector<2x256xf32>
    %250 = arith.addf %236, %249 : vector<2x256xf32>
    %c44 = arith.constant 44 : index
    %251 = memref.load %arg0[%c44] : memref<81xf32, #tpu.memory_space<smem>>
    %252 = vector.broadcast %251 : f32 to vector<2x256xf32>
    %253 = arith.mulf %252, %246 : vector<2x256xf32>
    %254 = arith.addf %240, %253 : vector<2x256xf32>
    %c71 = arith.constant 71 : index
    %255 = memref.load %arg0[%c71] : memref<81xf32, #tpu.memory_space<smem>>
    %256 = vector.broadcast %255 : f32 to vector<2x256xf32>
    %257 = arith.mulf %256, %246 : vector<2x256xf32>
    %258 = arith.addf %244, %257 : vector<2x256xf32>
    %259 = vector.extract_strided_slice %0 {offsets = [0, 2, 0], sizes = [2, 1, 256], strides = [1, 1, 1]} : vector<2x3x290xf32> to vector<2x1x256xf32>
    %260 = vector.shape_cast %259 : vector<2x1x256xf32> to vector<2x256xf32>
    %c18 = arith.constant 18 : index
    %261 = memref.load %arg0[%c18] : memref<81xf32, #tpu.memory_space<smem>>
    %262 = vector.broadcast %261 : f32 to vector<2x256xf32>
    %263 = arith.mulf %262, %260 : vector<2x256xf32>
    %264 = arith.addf %250, %263 : vector<2x256xf32>
    %c45 = arith.constant 45 : index
    %265 = memref.load %arg0[%c45] : memref<81xf32, #tpu.memory_space<smem>>
    %266 = vector.broadcast %265 : f32 to vector<2x256xf32>
    %267 = arith.mulf %266, %260 : vector<2x256xf32>
    %268 = arith.addf %254, %267 : vector<2x256xf32>
    %c72 = arith.constant 72 : index
    %269 = memref.load %arg0[%c72] : memref<81xf32, #tpu.memory_space<smem>>
    %270 = vector.broadcast %269 : f32 to vector<2x256xf32>
    %271 = arith.mulf %270, %260 : vector<2x256xf32>
    %272 = arith.addf %258, %271 : vector<2x256xf32>
    %273 = vector.extract_strided_slice %0 {offsets = [0, 2, 1], sizes = [2, 1, 256], strides = [1, 1, 1]} : vector<2x3x290xf32> to vector<2x1x256xf32>
    %274 = vector.shape_cast %273 : vector<2x1x256xf32> to vector<2x256xf32>
    %c19 = arith.constant 19 : index
    %275 = memref.load %arg0[%c19] : memref<81xf32, #tpu.memory_space<smem>>
    %276 = vector.broadcast %275 : f32 to vector<2x256xf32>
    %277 = arith.mulf %276, %274 : vector<2x256xf32>
    %278 = arith.addf %264, %277 : vector<2x256xf32>
    %c46 = arith.constant 46 : index
    %279 = memref.load %arg0[%c46] : memref<81xf32, #tpu.memory_space<smem>>
    %280 = vector.broadcast %279 : f32 to vector<2x256xf32>
    %281 = arith.mulf %280, %274 : vector<2x256xf32>
    %282 = arith.addf %268, %281 : vector<2x256xf32>
    %c73 = arith.constant 73 : index
    %283 = memref.load %arg0[%c73] : memref<81xf32, #tpu.memory_space<smem>>
    %284 = vector.broadcast %283 : f32 to vector<2x256xf32>
    %285 = arith.mulf %284, %274 : vector<2x256xf32>
    %286 = arith.addf %272, %285 : vector<2x256xf32>
    %287 = vector.extract_strided_slice %0 {offsets = [0, 2, 2], sizes = [2, 1, 256], strides = [1, 1, 1]} : vector<2x3x290xf32> to vector<2x1x256xf32>
    %288 = vector.shape_cast %287 : vector<2x1x256xf32> to vector<2x256xf32>
    %c20 = arith.constant 20 : index
    %289 = memref.load %arg0[%c20] : memref<81xf32, #tpu.memory_space<smem>>
    %290 = vector.broadcast %289 : f32 to vector<2x256xf32>
    %291 = arith.mulf %290, %288 : vector<2x256xf32>
    %292 = arith.addf %278, %291 : vector<2x256xf32>
    %c47 = arith.constant 47 : index
    %293 = memref.load %arg0[%c47] : memref<81xf32, #tpu.memory_space<smem>>
    %294 = vector.broadcast %293 : f32 to vector<2x256xf32>
    %295 = arith.mulf %294, %288 : vector<2x256xf32>
    %296 = arith.addf %282, %295 : vector<2x256xf32>
    %c74 = arith.constant 74 : index
    %297 = memref.load %arg0[%c74] : memref<81xf32, #tpu.memory_space<smem>>
    %298 = vector.broadcast %297 : f32 to vector<2x256xf32>
    %299 = arith.mulf %298, %288 : vector<2x256xf32>
    %300 = arith.addf %286, %299 : vector<2x256xf32>
    %301 = vector.extract_strided_slice %0 {offsets = [0, 2, 16], sizes = [2, 1, 256], strides = [1, 1, 1]} : vector<2x3x290xf32> to vector<2x1x256xf32>
    %302 = vector.shape_cast %301 : vector<2x1x256xf32> to vector<2x256xf32>
    %c21 = arith.constant 21 : index
    %303 = memref.load %arg0[%c21] : memref<81xf32, #tpu.memory_space<smem>>
    %304 = vector.broadcast %303 : f32 to vector<2x256xf32>
    %305 = arith.mulf %304, %302 : vector<2x256xf32>
    %306 = arith.addf %292, %305 : vector<2x256xf32>
    %c48 = arith.constant 48 : index
    %307 = memref.load %arg0[%c48] : memref<81xf32, #tpu.memory_space<smem>>
    %308 = vector.broadcast %307 : f32 to vector<2x256xf32>
    %309 = arith.mulf %308, %302 : vector<2x256xf32>
    %310 = arith.addf %296, %309 : vector<2x256xf32>
    %c75 = arith.constant 75 : index
    %311 = memref.load %arg0[%c75] : memref<81xf32, #tpu.memory_space<smem>>
    %312 = vector.broadcast %311 : f32 to vector<2x256xf32>
    %313 = arith.mulf %312, %302 : vector<2x256xf32>
    %314 = arith.addf %300, %313 : vector<2x256xf32>
    %315 = vector.extract_strided_slice %0 {offsets = [0, 2, 17], sizes = [2, 1, 256], strides = [1, 1, 1]} : vector<2x3x290xf32> to vector<2x1x256xf32>
    %316 = vector.shape_cast %315 : vector<2x1x256xf32> to vector<2x256xf32>
    %c22 = arith.constant 22 : index
    %317 = memref.load %arg0[%c22] : memref<81xf32, #tpu.memory_space<smem>>
    %318 = vector.broadcast %317 : f32 to vector<2x256xf32>
    %319 = arith.mulf %318, %316 : vector<2x256xf32>
    %320 = arith.addf %306, %319 : vector<2x256xf32>
    %c49 = arith.constant 49 : index
    %321 = memref.load %arg0[%c49] : memref<81xf32, #tpu.memory_space<smem>>
    %322 = vector.broadcast %321 : f32 to vector<2x256xf32>
    %323 = arith.mulf %322, %316 : vector<2x256xf32>
    %324 = arith.addf %310, %323 : vector<2x256xf32>
    %c76 = arith.constant 76 : index
    %325 = memref.load %arg0[%c76] : memref<81xf32, #tpu.memory_space<smem>>
    %326 = vector.broadcast %325 : f32 to vector<2x256xf32>
    %327 = arith.mulf %326, %316 : vector<2x256xf32>
    %328 = arith.addf %314, %327 : vector<2x256xf32>
    %329 = vector.extract_strided_slice %0 {offsets = [0, 2, 18], sizes = [2, 1, 256], strides = [1, 1, 1]} : vector<2x3x290xf32> to vector<2x1x256xf32>
    %330 = vector.shape_cast %329 : vector<2x1x256xf32> to vector<2x256xf32>
    %c23 = arith.constant 23 : index
    %331 = memref.load %arg0[%c23] : memref<81xf32, #tpu.memory_space<smem>>
    %332 = vector.broadcast %331 : f32 to vector<2x256xf32>
    %333 = arith.mulf %332, %330 : vector<2x256xf32>
    %334 = arith.addf %320, %333 : vector<2x256xf32>
    %c50 = arith.constant 50 : index
    %335 = memref.load %arg0[%c50] : memref<81xf32, #tpu.memory_space<smem>>
    %336 = vector.broadcast %335 : f32 to vector<2x256xf32>
    %337 = arith.mulf %336, %330 : vector<2x256xf32>
    %338 = arith.addf %324, %337 : vector<2x256xf32>
    %c77 = arith.constant 77 : index
    %339 = memref.load %arg0[%c77] : memref<81xf32, #tpu.memory_space<smem>>
    %340 = vector.broadcast %339 : f32 to vector<2x256xf32>
    %341 = arith.mulf %340, %330 : vector<2x256xf32>
    %342 = arith.addf %328, %341 : vector<2x256xf32>
    %343 = vector.extract_strided_slice %0 {offsets = [0, 2, 32], sizes = [2, 1, 256], strides = [1, 1, 1]} : vector<2x3x290xf32> to vector<2x1x256xf32>
    %344 = vector.shape_cast %343 : vector<2x1x256xf32> to vector<2x256xf32>
    %c24 = arith.constant 24 : index
    %345 = memref.load %arg0[%c24] : memref<81xf32, #tpu.memory_space<smem>>
    %346 = vector.broadcast %345 : f32 to vector<2x256xf32>
    %347 = arith.mulf %346, %344 : vector<2x256xf32>
    %348 = arith.addf %334, %347 : vector<2x256xf32>
    %c51 = arith.constant 51 : index
    %349 = memref.load %arg0[%c51] : memref<81xf32, #tpu.memory_space<smem>>
    %350 = vector.broadcast %349 : f32 to vector<2x256xf32>
    %351 = arith.mulf %350, %344 : vector<2x256xf32>
    %352 = arith.addf %338, %351 : vector<2x256xf32>
    %c78 = arith.constant 78 : index
    %353 = memref.load %arg0[%c78] : memref<81xf32, #tpu.memory_space<smem>>
    %354 = vector.broadcast %353 : f32 to vector<2x256xf32>
    %355 = arith.mulf %354, %344 : vector<2x256xf32>
    %356 = arith.addf %342, %355 : vector<2x256xf32>
    %357 = vector.extract_strided_slice %0 {offsets = [0, 2, 33], sizes = [2, 1, 256], strides = [1, 1, 1]} : vector<2x3x290xf32> to vector<2x1x256xf32>
    %358 = vector.shape_cast %357 : vector<2x1x256xf32> to vector<2x256xf32>
    %c25 = arith.constant 25 : index
    %359 = memref.load %arg0[%c25] : memref<81xf32, #tpu.memory_space<smem>>
    %360 = vector.broadcast %359 : f32 to vector<2x256xf32>
    %361 = arith.mulf %360, %358 : vector<2x256xf32>
    %362 = arith.addf %348, %361 : vector<2x256xf32>
    %c52 = arith.constant 52 : index
    %363 = memref.load %arg0[%c52] : memref<81xf32, #tpu.memory_space<smem>>
    %364 = vector.broadcast %363 : f32 to vector<2x256xf32>
    %365 = arith.mulf %364, %358 : vector<2x256xf32>
    %366 = arith.addf %352, %365 : vector<2x256xf32>
    %c79 = arith.constant 79 : index
    %367 = memref.load %arg0[%c79] : memref<81xf32, #tpu.memory_space<smem>>
    %368 = vector.broadcast %367 : f32 to vector<2x256xf32>
    %369 = arith.mulf %368, %358 : vector<2x256xf32>
    %370 = arith.addf %356, %369 : vector<2x256xf32>
    %371 = vector.extract_strided_slice %0 {offsets = [0, 2, 34], sizes = [2, 1, 256], strides = [1, 1, 1]} : vector<2x3x290xf32> to vector<2x1x256xf32>
    %372 = vector.shape_cast %371 : vector<2x1x256xf32> to vector<2x256xf32>
    %c26 = arith.constant 26 : index
    %373 = memref.load %arg0[%c26] : memref<81xf32, #tpu.memory_space<smem>>
    %374 = vector.broadcast %373 : f32 to vector<2x256xf32>
    %375 = arith.mulf %374, %372 : vector<2x256xf32>
    %376 = arith.addf %362, %375 : vector<2x256xf32>
    %c53 = arith.constant 53 : index
    %377 = memref.load %arg0[%c53] : memref<81xf32, #tpu.memory_space<smem>>
    %378 = vector.broadcast %377 : f32 to vector<2x256xf32>
    %379 = arith.mulf %378, %372 : vector<2x256xf32>
    %380 = arith.addf %366, %379 : vector<2x256xf32>
    %c80 = arith.constant 80 : index
    %381 = memref.load %arg0[%c80] : memref<81xf32, #tpu.memory_space<smem>>
    %382 = vector.broadcast %381 : f32 to vector<2x256xf32>
    %383 = arith.mulf %382, %372 : vector<2x256xf32>
    %384 = arith.addf %370, %383 : vector<2x256xf32>
    %385 = vector.shape_cast %376 : vector<2x256xf32> to vector<2x1x256xf32>
    %386 = vector.shape_cast %380 : vector<2x256xf32> to vector<2x1x256xf32>
    %387 = vector.shape_cast %384 : vector<2x256xf32> to vector<2x1x256xf32>
    %388 = tpu.concatenate %385, %386, %387 in 1 : vector<2x1x256xf32>, vector<2x1x256xf32>, vector<2x1x256xf32> -> vector<2x3x256xf32>
    %c0_6 = arith.constant 0 : index
    %c0_7 = arith.constant 0 : index
    %c0_8 = arith.constant 0 : index
    %389 = vector.load %arg3[%c0_6, %c0_7, %c0_8] : memref<2x3x256xf32, #tpu.memory_space<vmem>>, vector<2x3x256xf32>
    tpu.vector_store %arg3[%c0_6, %c0_7, %c0_8], %388 {strides = array<i32>} : memref<2x3x256xf32, #tpu.memory_space<vmem>>, vector<2x3x256xf32>,
    return
  }
}

</mosaic_0001>

<llo_original>
// kernel: conv2d_pallas.1
$region0: #{conv2d_pallas.1}
  #allocation0 [shape = 'u32[]', space=smem, size = 0x4, offset = 0x4, fixed_abs, tag = 'smem constant byte address 0x4 - core index']
  #allocation1 [shape = 'u32[144,128]{1,0:T(1,128)}', space=vmem, size = 0x12000, scoped, tag = 'internal scratch']
  %s0 = inlined_call_operand.vmem [shape: f32[81], index: 0, kind: input, shape index: {}]
  %s1 = inlined_call_operand.vmem [shape: f32[3], index: 1, kind: input, shape index: {}]
  %s2 = inlined_call_operand.vmem [shape: f32[2,3,290], index: 2, kind: input, shape index: {}]
  %s3 = inlined_call_operand.vmem [shape: f32[2,3,256], index: 3, kind: output, shape index: {}]
  %s4 = sld [smem:[#allocation0]]
  $region30: #{conv2d_pallas.1} parent=0
    _
  %s6 = ssub.s32 1, %s4
  %s7 = scalar_select 0, %s6, %s4
  $region1: #{conv2d_pallas.1} parent=0
    #allocation2 [shape = 'u8[512]{0}', space=smem, size = 0x200, scoped, tag = 'input window, operand 0, single buffered']
    #allocation3 [shape = 's32[1]{0}', space=sflag, size = 0x4, scoped, tag = 'scoped memory for conv2d_pallas.1']
    #allocation4 [shape = 'u8[512]{0}', space=smem, size = 0x200, scoped, tag = 'input window, operand 1, single buffered']
    #allocation5 [shape = 's32[1]{0}', space=sflag, size = 0x4, scoped, tag = 'scoped memory for conv2d_pallas.1']
    %8 = vsyncpa [#allocation3], 0
    %9 = vsyncpa [#allocation5], 0
    // Predicated region
    $region2: #{conv2d_pallas.1} parent=1 // pred_check
      _
    $region3: #{conv2d_pallas.1} parent=1 // pred_check_branch
      %11 = sbr.rel (0) target = $region5
    $region4: #{conv2d_pallas.1} parent=1 // pred_region
      %s13 = ssub.s32 16, 16
      %14 = vsyncadd [#allocation3], %s13
      %s16 = sshll.u32 %s0, 4
      %s17 = int_to_ptr.vmem [resolvable:$true] %s16
      %19 = dma.vmem_to_smem %s17, 16, [#allocation2], [#allocation3]
    $region5: #{conv2d_pallas.1} parent=1 // pred_fallthru
      _
    // Predicated region
    $region6: #{conv2d_pallas.1} parent=1 // pred_check
      _
    $region7: #{conv2d_pallas.1} parent=1 // pred_check_branch
      %21 = sbr.rel (0) target = $region9
    $region8: #{conv2d_pallas.1} parent=1 // pred_region
      %s23 = ssub.s32 16, 16
      %24 = vsyncadd [#allocation5], %s23
      %s26 = sshll.u32 %s1, 4
      %s27 = int_to_ptr.vmem [resolvable:$true] %s26
      %29 = dma.vmem_to_smem %s27, 16, [#allocation4], [#allocation5]
    $region9: #{conv2d_pallas.1} parent=1 // pred_fallthru
      _
    // Predicated region
    $region10: #{conv2d_pallas.1} parent=1 // pred_check
      _
    $region11: #{conv2d_pallas.1} parent=1 // pred_check_branch
      %31 = sbr.rel (0) target = $region13
    $region12: #{conv2d_pallas.1} parent=1 // pred_region
      _
    $region13: #{conv2d_pallas.1} parent=1 // pred_fallthru
      _
    // Predicated region
    $region14: #{conv2d_pallas.1} parent=1 // pred_check
      _
    $region15: #{conv2d_pallas.1} parent=1 // pred_check_branch
      %33 = sbr.rel (0) target = $region17
    $region16: #{conv2d_pallas.1} parent=1 // pred_region
      %34 = dma.done [#allocation3], 16
    $region17: #{conv2d_pallas.1} parent=1 // pred_fallthru
      _
    // Predicated region
    $region18: #{conv2d_pallas.1} parent=1 // pred_check
      _
    $region19: #{conv2d_pallas.1} parent=1 // pred_check_branch
      %36 = sbr.rel (0) target = $region21
    $region20: #{conv2d_pallas.1} parent=1 // pred_region
      %37 = dma.done [#allocation5], 16
    $region21: #{conv2d_pallas.1} parent=1 // pred_fallthru
      _
    %38 = sfence
    %v39 = vld [vmem:[%s2] sm:$0x77]
    %v40 = vld [vmem:[%s2 + $0x8] sm:$0x7]
    %v41 = vld [vmem:[%s2 + $0xc] sm:$0x77]
    %v42 = vld [vmem:[%s2 + $0x14] sm:$0x7]
    %s43 = sld [smem:[#allocation4]]
    %v44 = vstv %s43
    %s45 = sld [smem:[#allocation4 + $0x1]]
    %v46 = vstv %s45
    %s47 = sld [smem:[#allocation4 + $0x2]]
    %v48 = vstv %s47
    %s49 = sld [smem:[#allocation2]]
    %v50 = vstv %s49
    %v51 = vmul.f32 %v50, %v39
    %v52 = vmul.f32 %v50, %v41
    %v53 = vadd.f32 %v44, %v51
    %v54 = vadd.f32 %v44, %v52
    %s55 = sld [smem:[#allocation2 + $0x1b]]
    %v56 = vstv %s55
    %v57 = vmul.f32 %v56, %v39
    %v58 = vmul.f32 %v56, %v41
    %v59 = vadd.f32 %v46, %v57
    %v60 = vadd.f32 %v46, %v58
    %s61 = sld [smem:[#allocation2 + $0x36]]
    %v62 = vstv %s61
    %v63 = vmul.f32 %v62, %v39
    %v64 = vmul.f32 %v62, %v41
    %v65 = vadd.f32 %v48, %v63
    %v66 = vadd.f32 %v48, %v64
    %s67 = sld [smem:[#allocation2 + $0x1]]
    %v68 = vstv %s67
    %v69 = vmul.f32 %v68, %v39
    %v70 = vmul.f32 %v68, %v40
    %v71 = vmul.f32 %v68, %v41
    %v72 = vmul.f32 %v68, %v42
    %77 = vrot.lane.b32.xlu0 %v69, 127
    %v78 = vpop.permute.xlu0 %77
    %79 = vrot.lane.b32.xlu0 %v70, 127
    %v80 = vpop.permute.xlu0 %79
    %81 = vrot.lane.b32.xlu0 %v71, 127
    %v82 = vpop.permute.xlu0 %81
    %83 = vrot.lane.b32.xlu0 %v72, 127
    %v84 = vpop.permute.xlu0 %83
    %v85 = vrot.slane %v78, 4
    %v86 = vrot.slane %v80, 4
    %v87 = vrot.slane %v82, 4
    %v88 = vrot.slane %v84, 4
    %vm89 = vcmask 1043456
    %v90 = vsel %vm89, %v85, %v86
    %vm91 = vcmask 1039360
    %v92 = vsel %vm91, %v78, %v90
    %v93 = vsel %vm89, %v87, %v88
    %v94 = vsel %vm91, %v82, %v93
    %v97 = vadd.f32 %v53, %v92
    %v98 = vadd.f32 %v54, %v94
    %s99 = sld [smem:[#allocation2 + $0x1c]]
    %v100 = vstv %s99
    %v101 = vmul.f32 %v100, %v39
    %v102 = vmul.f32 %v100, %v40
    %v103 = vmul.f32 %v100, %v41
    %v104 = vmul.f32 %v100, %v42
    %109 = vrot.lane.b32.xlu0 %v101, 127
    %v110 = vpop.permute.xlu0 %109
    %111 = vrot.lane.b32.xlu0 %v102, 127
    %v112 = vpop.permute.xlu0 %111
    %113 = vrot.lane.b32.xlu0 %v103, 127
    %v114 = vpop.permute.xlu0 %113
    %115 = vrot.lane.b32.xlu0 %v104, 127
    %v116 = vpop.permute.xlu0 %115
    %v117 = vrot.slane %v110, 4
    %v118 = vrot.slane %v112, 4
    %v119 = vrot.slane %v114, 4
    %v120 = vrot.slane %v116, 4
    %v121 = vsel %vm89, %v117, %v118
    %v122 = vsel %vm91, %v110, %v121
    %v123 = vsel %vm89, %v119, %v120
    %v124 = vsel %vm91, %v114, %v123
    %v127 = vadd.f32 %v59, %v122
    %v128 = vadd.f32 %v60, %v124
    %s129 = sld [smem:[#allocation2 + $0x37]]
    %v130 = vstv %s129
    %v131 = vmul.f32 %v130, %v39
    %v132 = vmul.f32 %v130, %v40
    %v133 = vmul.f32 %v130, %v41
    %v134 = vmul.f32 %v130, %v42
    %139 = vrot.lane.b32.xlu0 %v131, 127
    %v140 = vpop.permute.xlu0 %139
    %141 = vrot.lane.b32.xlu0 %v132, 127
    %v142 = vpop.permute.xlu0 %141
    %143 = vrot.lane.b32.xlu0 %v133, 127
    %v144 = vpop.permute.xlu0 %143
    %145 = vrot.lane.b32.xlu0 %v134, 127
    %v146 = vpop.permute.xlu0 %145
    %v147 = vrot.slane %v140, 4
    %v148 = vrot.slane %v142, 4
    %v149 = vrot.slane %v144, 4
    %v150 = vrot.slane %v146, 4
    %v151 = vsel %vm89, %v147, %v148
    %v152 = vsel %vm91, %v140, %v151
    %v153 = vsel %vm89, %v149, %v150
    %v154 = vsel %vm91, %v144, %v153
    %v157 = vadd.f32 %v65, %v152
    %v158 = vadd.f32 %v66, %v154
    %s159 = sld [smem:[#allocation2 + $0x2]]
    %v160 = vstv %s159
    %v161 = vmul.f32 %v160, %v39
    %v162 = vmul.f32 %v160, %v40
    %v163 = vmul.f32 %v160, %v41
    %v164 = vmul.f32 %v160, %v42
    %169 = vrot.lane.b32.xlu0 %v161, 126
    %v170 = vpop.permute.xlu0 %169
    %171 = vrot.lane.b32.xlu0 %v162, 126
    %v172 = vpop.permute.xlu0 %171
    %173 = vrot.lane.b32.xlu0 %v163, 126
    %v174 = vpop.permute.xlu0 %173
    %175 = vrot.lane.b32.xlu0 %v164, 126
    %v176 = vpop.permute.xlu0 %175
    %v177 = vrot.slane %v170, 4
    %v178 = vrot.slane %v172, 4
    %v179 = vrot.slane %v174, 4
    %v180 = vrot.slane %v176, 4
    %v181 = vsel %vm89, %v177, %v178
    %vm182 = vcmask 1031168
    %v183 = vsel %vm182, %v170, %v181
    %v184 = vsel %vm89, %v179, %v180
    %v185 = vsel %vm182, %v174, %v184
    %v188 = vadd.f32 %v97, %v183
    %v189 = vadd.f32 %v98, %v185
    %s190 = sld [smem:[#allocation2 + $0x1d]]
    %v191 = vstv %s190
    %v192 = vmul.f32 %v191, %v39
    %v193 = vmul.f32 %v191, %v40
    %v194 = vmul.f32 %v191, %v41
    %v195 = vmul.f32 %v191, %v42
    %200 = vrot.lane.b32.xlu0 %v192, 126
    %v201 = vpop.permute.xlu0 %200
    %202 = vrot.lane.b32.xlu0 %v193, 126
    %v203 = vpop.permute.xlu0 %202
    %204 = vrot.lane.b32.xlu0 %v194, 126
    %v205 = vpop.permute.xlu0 %204
    %206 = vrot.lane.b32.xlu0 %v195, 126
    %v207 = vpop.permute.xlu0 %206
    %v208 = vrot.slane %v201, 4
    %v209 = vrot.slane %v203, 4
    %v210 = vrot.slane %v205, 4
    %v211 = vrot.slane %v207, 4
    %v212 = vsel %vm89, %v208, %v209
    %v213 = vsel %vm182, %v201, %v212
    %v214 = vsel %vm89, %v210, %v211
    %v215 = vsel %vm182, %v205, %v214
    %v218 = vadd.f32 %v127, %v213
    %v219 = vadd.f32 %v128, %v215
    %s220 = sld [smem:[#allocation2 + $0x38]]
    %v221 = vstv %s220
    %v222 = vmul.f32 %v221, %v39
    %v223 = vmul.f32 %v221, %v40
    %v224 = vmul.f32 %v221, %v41
    %v225 = vmul.f32 %v221, %v42
    %230 = vrot.lane.b32.xlu0 %v222, 126
    %v231 = vpop.permute.xlu0 %230
    %232 = vrot.lane.b32.xlu0 %v223, 126
    %v233 = vpop.permute.xlu0 %232
    %234 = vrot.lane.b32.xlu0 %v224, 126
    %v235 = vpop.permute.xlu0 %234
    %236 = vrot.lane.b32.xlu0 %v225, 126
    %v237 = vpop.permute.xlu0 %236
    %v238 = vrot.slane %v231, 4
    %v239 = vrot.slane %v233, 4
    %v240 = vrot.slane %v235, 4
    %v241 = vrot.slane %v237, 4
    %v242 = vsel %vm89, %v238, %v239
    %v243 = vsel %vm182, %v231, %v242
    %v244 = vsel %vm89, %v240, %v241
    %v245 = vsel %vm182, %v235, %v244
    %v248 = vadd.f32 %v157, %v243
    %v249 = vadd.f32 %v158, %v245
    %s250 = sld [smem:[#allocation2 + $0x3]]
    %v251 = vstv %s250
    %v252 = vmul.f32 %v251, %v39
    %v253 = vmul.f32 %v251, %v40
    %v254 = vmul.f32 %v251, %v41
    %v255 = vmul.f32 %v251, %v42
    %260 = vrot.lane.b32.xlu0 %v252, 112
    %v261 = vpop.permute.xlu0 %260
    %262 = vrot.lane.b32.xlu0 %v253, 112
    %v263 = vpop.permute.xlu0 %262
    %264 = vrot.lane.b32.xlu0 %v254, 112
    %v265 = vpop.permute.xlu0 %264
    %266 = vrot.lane.b32.xlu0 %v255, 112
    %v267 = vpop.permute.xlu0 %266
    %v268 = vrot.slane %v261, 4
    %v269 = vrot.slane %v263, 4
    %v270 = vrot.slane %v265, 4
    %v271 = vrot.slane %v267, 4
    %v272 = vsel %vm89, %v268, %v269
    %vm273 = vcmask 916480
    %v274 = vsel %vm273, %v261, %v272
    %v275 = vsel %vm89, %v270, %v271
    %v276 = vsel %vm273, %v265, %v275
    %v279 = vadd.f32 %v188, %v274
    %v280 = vadd.f32 %v189, %v276
    %s281 = sld [smem:[#allocation2 + $0x1e]]
    %v282 = vstv %s281
    %v283 = vmul.f32 %v282, %v39
    %v284 = vmul.f32 %v282, %v40
    %v285 = vmul.f32 %v282, %v41
    %v286 = vmul.f32 %v282, %v42
    %291 = vrot.lane.b32.xlu0 %v283, 112
    %v292 = vpop.permute.xlu0 %291
    %293 = vrot.lane.b32.xlu0 %v284, 112
    %v294 = vpop.permute.xlu0 %293
    %295 = vrot.lane.b32.xlu0 %v285, 112
    %v296 = vpop.permute.xlu0 %295
    %297 = vrot.lane.b32.xlu0 %v286, 112
    %v298 = vpop.permute.xlu0 %297
    %v299 = vrot.slane %v292, 4
    %v300 = vrot.slane %v294, 4
    %v301 = vrot.slane %v296, 4
    %v302 = vrot.slane %v298, 4
    %v303 = vsel %vm89, %v299, %v300
    %v304 = vsel %vm273, %v292, %v303
    %v305 = vsel %vm89, %v301, %v302
    %v306 = vsel %vm273, %v296, %v305
    %v309 = vadd.f32 %v218, %v304
    %v310 = vadd.f32 %v219, %v306
    %s311 = sld [smem:[#allocation2 + $0x39]]
    %v312 = vstv %s311
    %v313 = vmul.f32 %v312, %v39
    %v314 = vmul.f32 %v312, %v40
    %v315 = vmul.f32 %v312, %v41
    %v316 = vmul.f32 %v312, %v42
    %321 = vrot.lane.b32.xlu0 %v313, 112
    %v322 = vpop.permute.xlu0 %321
    %323 = vrot.lane.b32.xlu0 %v314, 112
    %v324 = vpop.permute.xlu0 %323
    %325 = vrot.lane.b32.xlu0 %v315, 112
    %v326 = vpop.permute.xlu0 %325
    %327 = vrot.lane.b32.xlu0 %v316, 112
    %v328 = vpop.permute.xlu0 %327
    %v329 = vrot.slane %v322, 4
    %v330 = vrot.slane %v324, 4
    %v331 = vrot.slane %v326, 4
    %v332 = vrot.slane %v328, 4
    %v333 = vsel %vm89, %v329, %v330
    %v334 = vsel %vm273, %v322, %v333
    %v335 = vsel %vm89, %v331, %v332
    %v336 = vsel %vm273, %v326, %v335
    %v339 = vadd.f32 %v248, %v334
    %v340 = vadd.f32 %v249, %v336
    %s341 = sld [smem:[#allocation2 + $0x4]]
    %v342 = vstv %s341
    %v343 = vmul.f32 %v342, %v39
    %v344 = vmul.f32 %v342, %v40
    %v345 = vmul.f32 %v342, %v41
    %v346 = vmul.f32 %v342, %v42
    %351 = vrot.lane.b32.xlu0 %v343, 111
    %v352 = vpop.permute.xlu0 %351
    %353 = vrot.lane.b32.xlu0 %v344, 111
    %v354 = vpop.permute.xlu0 %353
    %355 = vrot.lane.b32.xlu0 %v345, 111
    %v356 = vpop.permute.xlu0 %355
    %357 = vrot.lane.b32.xlu0 %v346, 111
    %v358 = vpop.permute.xlu0 %357
    %v359 = vrot.slane %v352, 4
    %v360 = vrot.slane %v354, 4
    %v361 = vrot.slane %v356, 4
    %v362 = vrot.slane %v358, 4
    %v363 = vsel %vm89, %v359, %v360
    %vm364 = vcmask 908288
    %v365 = vsel %vm364, %v352, %v363
    %v366 = vsel %vm89, %v361, %v362
    %v367 = vsel %vm364, %v356, %v366
    %v370 = vadd.f32 %v279, %v365
    %v371 = vadd.f32 %v280, %v367
    %s372 = sld [smem:[#allocation2 + $0x1f]]
    %v373 = vstv %s372
    %v374 = vmul.f32 %v373, %v39
    %v375 = vmul.f32 %v373, %v40
    %v376 = vmul.f32 %v373, %v41
    %v377 = vmul.f32 %v373, %v42
    %382 = vrot.lane.b32.xlu0 %v374, 111
    %v383 = vpop.permute.xlu0 %382
    %384 = vrot.lane.b32.xlu0 %v375, 111
    %v385 = vpop.permute.xlu0 %384
    %386 = vrot.lane.b32.xlu0 %v376, 111
    %v387 = vpop.permute.xlu0 %386
    %388 = vrot.lane.b32.xlu0 %v377, 111
    %v389 = vpop.permute.xlu0 %388
    %v390 = vrot.slane %v383, 4
    %v391 = vrot.slane %v385, 4
    %v392 = vrot.slane %v387, 4
    %v393 = vrot.slane %v389, 4
    %v394 = vsel %vm89, %v390, %v391
    %v395 = vsel %vm364, %v383, %v394
    %v396 = vsel %vm89, %v392, %v393
    %v397 = vsel %vm364, %v387, %v396
    %v400 = vadd.f32 %v309, %v395
    %v401 = vadd.f32 %v310, %v397
    %s402 = sld [smem:[#allocation2 + $0x3a]]
    %v403 = vstv %s402
    %v404 = vmul.f32 %v403, %v39
    %v405 = vmul.f32 %v403, %v40
    %v406 = vmul.f32 %v403, %v41
    %v407 = vmul.f32 %v403, %v42
    %412 = vrot.lane.b32.xlu0 %v404, 111
    %v413 = vpop.permute.xlu0 %412
    %414 = vrot.lane.b32.xlu0 %v405, 111
    %v415 = vpop.permute.xlu0 %414
    %416 = vrot.lane.b32.xlu0 %v406, 111
    %v417 = vpop.permute.xlu0 %416
    %418 = vrot.lane.b32.xlu0 %v407, 111
    %v419 = vpop.permute.xlu0 %418
    %v420 = vrot.slane %v413, 4
    %v421 = vrot.slane %v415, 4
    %v422 = vrot.slane %v417, 4
    %v423 = vrot.slane %v419, 4
    %v424 = vsel %vm89, %v420, %v421
    %v425 = vsel %vm364, %v413, %v424
    %v426 = vsel %vm89, %v422, %v423
    %v427 = vsel %vm364, %v417, %v426
    %v430 = vadd.f32 %v339, %v425
    %v431 = vadd.f32 %v340, %v427
    %s432 = sld [smem:[#allocation2 + $0x5]]
    %v433 = vstv %s432
    %v434 = vmul.f32 %v433, %v39
    %v435 = vmul.f32 %v433, %v40
    %v436 = vmul.f32 %v433, %v41
    %v437 = vmul.f32 %v433, %v42
    %442 = vrot.lane.b32.xlu0 %v434, 110
    %v443 = vpop.permute.xlu0 %442
    %444 = vrot.lane.b32.xlu0 %v435, 110
    %v445 = vpop.permute.xlu0 %444
    %446 = vrot.lane.b32.xlu0 %v436, 110
    %v447 = vpop.permute.xlu0 %446
    %448 = vrot.lane.b32.xlu0 %v437, 110
    %v449 = vpop.permute.xlu0 %448
    %v450 = vrot.slane %v443, 4
    %v451 = vrot.slane %v445, 4
    %v452 = vrot.slane %v447, 4
    %v453 = vrot.slane %v449, 4
    %v454 = vsel %vm89, %v450, %v451
    %vm455 = vcmask 900096
    %v456 = vsel %vm455, %v443, %v454
    %v457 = vsel %vm89, %v452, %v453
    %v458 = vsel %vm455, %v447, %v457
    %v461 = vadd.f32 %v370, %v456
    %v462 = vadd.f32 %v371, %v458
    %s463 = sld [smem:[#allocation2 + $0x20]]
    %v464 = vstv %s463
    %v465 = vmul.f32 %v464, %v39
    %v466 = vmul.f32 %v464, %v40
    %v467 = vmul.f32 %v464, %v41
    %v468 = vmul.f32 %v464, %v42
    %473 = vrot.lane.b32.xlu0 %v465, 110
    %v474 = vpop.permute.xlu0 %473
    %475 = vrot.lane.b32.xlu0 %v466, 110
    %v476 = vpop.permute.xlu0 %475
    %477 = vrot.lane.b32.xlu0 %v467, 110
    %v478 = vpop.permute.xlu0 %477
    %479 = vrot.lane.b32.xlu0 %v468, 110
    %v480 = vpop.permute.xlu0 %479
    %v481 = vrot.slane %v474, 4
    %v482 = vrot.slane %v476, 4
    %v483 = vrot.slane %v478, 4
    %v484 = vrot.slane %v480, 4
    %v485 = vsel %vm89, %v481, %v482
    %v486 = vsel %vm455, %v474, %v485
    %v487 = vsel %vm89, %v483, %v484
    %v488 = vsel %vm455, %v478, %v487
    %v491 = vadd.f32 %v400, %v486
    %v492 = vadd.f32 %v401, %v488
    %s493 = sld [smem:[#allocation2 + $0x3b]]
    %v494 = vstv %s493
    %v495 = vmul.f32 %v494, %v39
    %v496 = vmul.f32 %v494, %v40
    %v497 = vmul.f32 %v494, %v41
    %v498 = vmul.f32 %v494, %v42
    %503 = vrot.lane.b32.xlu0 %v495, 110
    %v504 = vpop.permute.xlu0 %503
    %505 = vrot.lane.b32.xlu0 %v496, 110
    %v506 = vpop.permute.xlu0 %505
    %507 = vrot.lane.b32.xlu0 %v497, 110
    %v508 = vpop.permute.xlu0 %507
    %509 = vrot.lane.b32.xlu0 %v498, 110
    %v510 = vpop.permute.xlu0 %509
    %v511 = vrot.slane %v504, 4
    %v512 = vrot.slane %v506, 4
    %v513 = vrot.slane %v508, 4
    %v514 = vrot.slane %v510, 4
    %v515 = vsel %vm89, %v511, %v512
    %v516 = vsel %vm455, %v504, %v515
    %v517 = vsel %vm89, %v513, %v514
    %v518 = vsel %vm455, %v508, %v517
    %v521 = vadd.f32 %v430, %v516
    %v522 = vadd.f32 %v431, %v518
    %s523 = sld [smem:[#allocation2 + $0x6]]
    %v524 = vstv %s523
    %v525 = vmul.f32 %v524, %v39
    %v526 = vmul.f32 %v524, %v40
    %v527 = vmul.f32 %v524, %v41
    %v528 = vmul.f32 %v524, %v42
    %533 = vrot.lane.b32.xlu0 %v525, 96
    %v534 = vpop.permute.xlu0 %533
    %535 = vrot.lane.b32.xlu0 %v526, 96
    %v536 = vpop.permute.xlu0 %535
    %537 = vrot.lane.b32.xlu0 %v527, 96
    %v538 = vpop.permute.xlu0 %537
    %539 = vrot.lane.b32.xlu0 %v528, 96
    %v540 = vpop.permute.xlu0 %539
    %v541 = vrot.slane %v534, 4
    %v542 = vrot.slane %v536, 4
    %v543 = vrot.slane %v538, 4
    %v544 = vrot.slane %v540, 4
    %v545 = vsel %vm89, %v541, %v542
    %vm546 = vcmask 785408
    %v547 = vsel %vm546, %v534, %v545
    %v548 = vsel %vm89, %v543, %v544
    %v549 = vsel %vm546, %v538, %v548
    %v552 = vadd.f32 %v461, %v547
    %v553 = vadd.f32 %v462, %v549
    %s554 = sld [smem:[#allocation2 + $0x21]]
    %v555 = vstv %s554
    %v556 = vmul.f32 %v555, %v39
    %v557 = vmul.f32 %v555, %v40
    %v558 = vmul.f32 %v555, %v41
    %v559 = vmul.f32 %v555, %v42
    %564 = vrot.lane.b32.xlu0 %v556, 96
    %v565 = vpop.permute.xlu0 %564
    %566 = vrot.lane.b32.xlu0 %v557, 96
    %v567 = vpop.permute.xlu0 %566
    %568 = vrot.lane.b32.xlu0 %v558, 96
    %v569 = vpop.permute.xlu0 %568
    %570 = vrot.lane.b32.xlu0 %v559, 96
    %v571 = vpop.permute.xlu0 %570
    %v572 = vrot.slane %v565, 4
    %v573 = vrot.slane %v567, 4
    %v574 = vrot.slane %v569, 4
    %v575 = vrot.slane %v571, 4
    %v576 = vsel %vm89, %v572, %v573
    %v577 = vsel %vm546, %v565, %v576
    %v578 = vsel %vm89, %v574, %v575
    %v579 = vsel %vm546, %v569, %v578
    %v582 = vadd.f32 %v491, %v577
    %v583 = vadd.f32 %v492, %v579
    %s584 = sld [smem:[#allocation2 + $0x3c]]
    %v585 = vstv %s584
    %v586 = vmul.f32 %v585, %v39
    %v587 = vmul.f32 %v585, %v40
    %v588 = vmul.f32 %v585, %v41
    %v589 = vmul.f32 %v585, %v42
    %594 = vrot.lane.b32.xlu0 %v586, 96
    %v595 = vpop.permute.xlu0 %594
    %596 = vrot.lane.b32.xlu0 %v587, 96
    %v597 = vpop.permute.xlu0 %596
    %598 = vrot.lane.b32.xlu0 %v588, 96
    %v599 = vpop.permute.xlu0 %598
    %600 = vrot.lane.b32.xlu0 %v589, 96
    %v601 = vpop.permute.xlu0 %600
    %v602 = vrot.slane %v595, 4
    %v603 = vrot.slane %v597, 4
    %v604 = vrot.slane %v599, 4
    %v605 = vrot.slane %v601, 4
    %v606 = vsel %vm89, %v602, %v603
    %v607 = vsel %vm546, %v595, %v606
    %v608 = vsel %vm89, %v604, %v605
    %v609 = vsel %vm546, %v599, %v608
    %v612 = vadd.f32 %v521, %v607
    %v613 = vadd.f32 %v522, %v609
    %s614 = sld [smem:[#allocation2 + $0x7]]
    %v615 = vstv %s614
    %v616 = vmul.f32 %v615, %v39
    %v617 = vmul.f32 %v615, %v40
    %v618 = vmul.f32 %v615, %v41
    %v619 = vmul.f32 %v615, %v42
    %624 = vrot.lane.b32.xlu0 %v616, 95
    %v625 = vpop.permute.xlu0 %624
    %626 = vrot.lane.b32.xlu0 %v617, 95
    %v627 = vpop.permute.xlu0 %626
    %628 = vrot.lane.b32.xlu0 %v618, 95
    %v629 = vpop.permute.xlu0 %628
    %630 = vrot.lane.b32.xlu0 %v619, 95
    %v631 = vpop.permute.xlu0 %630
    %v632 = vrot.slane %v625, 4
    %v633 = vrot.slane %v627, 4
    %v634 = vrot.slane %v629, 4
    %v635 = vrot.slane %v631, 4
    %v636 = vsel %vm89, %v632, %v633
    %vm637 = vcmask 777216
    %v638 = vsel %vm637, %v625, %v636
    %v639 = vsel %vm89, %v634, %v635
    %v640 = vsel %vm637, %v629, %v639
    %v643 = vadd.f32 %v552, %v638
    %v644 = vadd.f32 %v553, %v640
    %s645 = sld [smem:[#allocation2 + $0x22]]
    %v646 = vstv %s645
    %v647 = vmul.f32 %v646, %v39
    %v648 = vmul.f32 %v646, %v40
    %v649 = vmul.f32 %v646, %v41
    %v650 = vmul.f32 %v646, %v42
    %655 = vrot.lane.b32.xlu0 %v647, 95
    %v656 = vpop.permute.xlu0 %655
    %657 = vrot.lane.b32.xlu0 %v648, 95
    %v658 = vpop.permute.xlu0 %657
    %659 = vrot.lane.b32.xlu0 %v649, 95
    %v660 = vpop.permute.xlu0 %659
    %661 = vrot.lane.b32.xlu0 %v650, 95
    %v662 = vpop.permute.xlu0 %661
    %v663 = vrot.slane %v656, 4
    %v664 = vrot.slane %v658, 4
    %v665 = vrot.slane %v660, 4
    %v666 = vrot.slane %v662, 4
    %v667 = vsel %vm89, %v663, %v664
    %v668 = vsel %vm637, %v656, %v667
    %v669 = vsel %vm89, %v665, %v666
    %v670 = vsel %vm637, %v660, %v669
    %v673 = vadd.f32 %v582, %v668
    %v674 = vadd.f32 %v583, %v670
    %s675 = sld [smem:[#allocation2 + $0x3d]]
    %v676 = vstv %s675
    %v677 = vmul.f32 %v676, %v39
    %v678 = vmul.f32 %v676, %v40
    %v679 = vmul.f32 %v676, %v41
    %v680 = vmul.f32 %v676, %v42
    %685 = vrot.lane.b32.xlu0 %v677, 95
    %v686 = vpop.permute.xlu0 %685
    %687 = vrot.lane.b32.xlu0 %v678, 95
    %v688 = vpop.permute.xlu0 %687
    %689 = vrot.lane.b32.xlu0 %v679, 95
    %v690 = vpop.permute.xlu0 %689
    %691 = vrot.lane.b32.xlu0 %v680, 95
    %v692 = vpop.permute.xlu0 %691
    %v693 = vrot.slane %v686, 4
    %v694 = vrot.slane %v688, 4
    %v695 = vrot.slane %v690, 4
    %v696 = vrot.slane %v692, 4
    %v697 = vsel %vm89, %v693, %v694
    %v698 = vsel %vm637, %v686, %v697
    %v699 = vsel %vm89, %v695, %v696
    %v700 = vsel %vm637, %v690, %v699
    %v703 = vadd.f32 %v612, %v698
    %v704 = vadd.f32 %v613, %v700
    %s705 = sld [smem:[#allocation2 + $0x8]]
    %v706 = vstv %s705
    %v707 = vmul.f32 %v706, %v39
    %v708 = vmul.f32 %v706, %v40
    %v709 = vmul.f32 %v706, %v41
    %v710 = vmul.f32 %v706, %v42
    %715 = vrot.lane.b32.xlu0 %v707, 94
    %v716 = vpop.permute.xlu0 %715
    %717 = vrot.lane.b32.xlu0 %v708, 94
    %v718 = vpop.permute.xlu0 %717
    %719 = vrot.lane.b32.xlu0 %v709, 94
    %v720 = vpop.permute.xlu0 %719
    %721 = vrot.lane.b32.xlu0 %v710, 94
    %v722 = vpop.permute.xlu0 %721
    %v723 = vrot.slane %v716, 4
    %v724 = vrot.slane %v718, 4
    %v725 = vrot.slane %v720, 4
    %v726 = vrot.slane %v722, 4
    %v727 = vsel %vm89, %v723, %v724
    %vm728 = vcmask 769024
    %v729 = vsel %vm728, %v716, %v727
    %v730 = vsel %vm89, %v725, %v726
    %v731 = vsel %vm728, %v720, %v730
    %v734 = vadd.f32 %v643, %v729
    %v735 = vadd.f32 %v644, %v731
    %s736 = sld [smem:[#allocation2 + $0x23]]
    %v737 = vstv %s736
    %v738 = vmul.f32 %v737, %v39
    %v739 = vmul.f32 %v737, %v40
    %v740 = vmul.f32 %v737, %v41
    %v741 = vmul.f32 %v737, %v42
    %746 = vrot.lane.b32.xlu0 %v738, 94
    %v747 = vpop.permute.xlu0 %746
    %748 = vrot.lane.b32.xlu0 %v739, 94
    %v749 = vpop.permute.xlu0 %748
    %750 = vrot.lane.b32.xlu0 %v740, 94
    %v751 = vpop.permute.xlu0 %750
    %752 = vrot.lane.b32.xlu0 %v741, 94
    %v753 = vpop.permute.xlu0 %752
    %v754 = vrot.slane %v747, 4
    %v755 = vrot.slane %v749, 4
    %v756 = vrot.slane %v751, 4
    %v757 = vrot.slane %v753, 4
    %v758 = vsel %vm89, %v754, %v755
    %v759 = vsel %vm728, %v747, %v758
    %v760 = vsel %vm89, %v756, %v757
    %v761 = vsel %vm728, %v751, %v760
    %v764 = vadd.f32 %v673, %v759
    %v765 = vadd.f32 %v674, %v761
    %s766 = sld [smem:[#allocation2 + $0x3e]]
    %v767 = vstv %s766
    %v768 = vmul.f32 %v767, %v39
    %v769 = vmul.f32 %v767, %v40
    %v770 = vmul.f32 %v767, %v41
    %v771 = vmul.f32 %v767, %v42
    %776 = vrot.lane.b32.xlu0 %v768, 94
    %v777 = vpop.permute.xlu0 %776
    %778 = vrot.lane.b32.xlu0 %v769, 94
    %v779 = vpop.permute.xlu0 %778
    %780 = vrot.lane.b32.xlu0 %v770, 94
    %v781 = vpop.permute.xlu0 %780
    %782 = vrot.lane.b32.xlu0 %v771, 94
    %v783 = vpop.permute.xlu0 %782
    %v784 = vrot.slane %v777, 4
    %v785 = vrot.slane %v779, 4
    %v786 = vrot.slane %v781, 4
    %v787 = vrot.slane %v783, 4
    %v788 = vsel %vm89, %v784, %v785
    %v789 = vsel %vm728, %v777, %v788
    %v790 = vsel %vm89, %v786, %v787
    %v791 = vsel %vm728, %v781, %v790
    %v794 = vadd.f32 %v703, %v789
    %v795 = vadd.f32 %v704, %v791
    %s796 = sld [smem:[#allocation2 + $0x9]]
    %v797 = vstv %s796
    %v798 = vmul.f32 %v797, %v39
    %v799 = vmul.f32 %v797, %v41
    %v802 = vrot.slane %v798, 5
    %v803 = vrot.slane %v802, 4
    %v804 = vrot.slane %v799, 5
    %v805 = vrot.slane %v804, 4
    %v808 = vadd.f32 %v734, %v803
    %v809 = vadd.f32 %v735, %v805
    %s810 = sld [smem:[#allocation2 + $0x24]]
    %v811 = vstv %s810
    %v812 = vmul.f32 %v811, %v39
    %v813 = vmul.f32 %v811, %v41
    %v816 = vrot.slane %v812, 5
    %v817 = vrot.slane %v816, 4
    %v818 = vrot.slane %v813, 5
    %v819 = vrot.slane %v818, 4
    %v822 = vadd.f32 %v764, %v817
    %v823 = vadd.f32 %v765, %v819
    %s824 = sld [smem:[#allocation2 + $0x3f]]
    %v825 = vstv %s824
    %v826 = vmul.f32 %v825, %v39
    %v827 = vmul.f32 %v825, %v41
    %v830 = vrot.slane %v826, 5
    %v831 = vrot.slane %v830, 4
    %v832 = vrot.slane %v827, 5
    %v833 = vrot.slane %v832, 4
    %v836 = vadd.f32 %v794, %v831
    %v837 = vadd.f32 %v795, %v833
    %s838 = sld [smem:[#allocation2 + $0xa]]
    %v839 = vstv %s838
    %v840 = vmul.f32 %v839, %v39
    %v841 = vmul.f32 %v839, %v40
    %v842 = vmul.f32 %v839, %v41
    %v843 = vmul.f32 %v839, %v42
    %v848 = vrot.slane %v840, 5
    %v849 = vrot.slane %v848, 4
    %v850 = vrot.slane %v841, 5
    %v851 = vrot.slane %v850, 4
    %v852 = vrot.slane %v842, 5
    %v853 = vrot.slane %v852, 4
    %v854 = vrot.slane %v843, 5
    %v855 = vrot.slane %v854, 4
    %856 = vrot.lane.b32.xlu0 %v849, 127
    %v857 = vpop.permute.xlu0 %856
    %858 = vrot.lane.b32.xlu0 %v851, 127
    %v859 = vpop.permute.xlu0 %858
    %860 = vrot.lane.b32.xlu0 %v853, 127
    %v861 = vpop.permute.xlu0 %860
    %862 = vrot.lane.b32.xlu0 %v855, 127
    %v863 = vpop.permute.xlu0 %862
    %v864 = vrot.slane %v857, 4
    %v865 = vrot.slane %v859, 4
    %v866 = vrot.slane %v861, 4
    %v867 = vrot.slane %v863, 4
    %v868 = vsel %vm89, %v864, %v865
    %v869 = vsel %vm91, %v857, %v868
    %v870 = vsel %vm89, %v866, %v867
    %v871 = vsel %vm91, %v861, %v870
    %v874 = vadd.f32 %v808, %v869
    %v875 = vadd.f32 %v809, %v871
    %s876 = sld [smem:[#allocation2 + $0x25]]
    %v877 = vstv %s876
    %v878 = vmul.f32 %v877, %v39
    %v879 = vmul.f32 %v877, %v40
    %v880 = vmul.f32 %v877, %v41
    %v881 = vmul.f32 %v877, %v42
    %v886 = vrot.slane %v878, 5
    %v887 = vrot.slane %v886, 4
    %v888 = vrot.slane %v879, 5
    %v889 = vrot.slane %v888, 4
    %v890 = vrot.slane %v880, 5
    %v891 = vrot.slane %v890, 4
    %v892 = vrot.slane %v881, 5
    %v893 = vrot.slane %v892, 4
    %894 = vrot.lane.b32.xlu0 %v887, 127
    %v895 = vpop.permute.xlu0 %894
    %896 = vrot.lane.b32.xlu0 %v889, 127
    %v897 = vpop.permute.xlu0 %896
    %898 = vrot.lane.b32.xlu0 %v891, 127
    %v899 = vpop.permute.xlu0 %898
    %900 = vrot.lane.b32.xlu0 %v893, 127
    %v901 = vpop.permute.xlu0 %900
    %v902 = vrot.slane %v895, 4
    %v903 = vrot.slane %v897, 4
    %v904 = vrot.slane %v899, 4
    %v905 = vrot.slane %v901, 4
    %v906 = vsel %vm89, %v902, %v903
    %v907 = vsel %vm91, %v895, %v906
    %v908 = vsel %vm89, %v904, %v905
    %v909 = vsel %vm91, %v899, %v908
    %v912 = vadd.f32 %v822, %v907
    %v913 = vadd.f32 %v823, %v909
    %s914 = sld [smem:[#allocation2 + $0x40]]
    %v915 = vstv %s914
    %v916 = vmul.f32 %v915, %v39
    %v917 = vmul.f32 %v915, %v40
    %v918 = vmul.f32 %v915, %v41
    %v919 = vmul.f32 %v915, %v42
    %v924 = vrot.slane %v916, 5
    %v925 = vrot.slane %v924, 4
    %v926 = vrot.slane %v917, 5
    %v927 = vrot.slane %v926, 4
    %v928 = vrot.slane %v918, 5
    %v929 = vrot.slane %v928, 4
    %v930 = vrot.slane %v919, 5
    %v931 = vrot.slane %v930, 4
    %932 = vrot.lane.b32.xlu0 %v925, 127
    %v933 = vpop.permute.xlu0 %932
    %934 = vrot.lane.b32.xlu0 %v927, 127
    %v935 = vpop.permute.xlu0 %934
    %936 = vrot.lane.b32.xlu0 %v929, 127
    %v937 = vpop.permute.xlu0 %936
    %938 = vrot.lane.b32.xlu0 %v931, 127
    %v939 = vpop.permute.xlu0 %938
    %v940 = vrot.slane %v933, 4
    %v941 = vrot.slane %v935, 4
    %v942 = vrot.slane %v937, 4
    %v943 = vrot.slane %v939, 4
    %v944 = vsel %vm89, %v940, %v941
    %v945 = vsel %vm91, %v933, %v944
    %v946 = vsel %vm89, %v942, %v943
    %v947 = vsel %vm91, %v937, %v946
    %v950 = vadd.f32 %v836, %v945
    %v951 = vadd.f32 %v837, %v947
    %s952 = sld [smem:[#allocation2 + $0xb]]
    %v953 = vstv %s952
    %v954 = vmul.f32 %v953, %v39
    %v955 = vmul.f32 %v953, %v40
    %v956 = vmul.f32 %v953, %v41
    %v957 = vmul.f32 %v953, %v42
    %v962 = vrot.slane %v954, 5
    %v963 = vrot.slane %v962, 4
    %v964 = vrot.slane %v955, 5
    %v965 = vrot.slane %v964, 4
    %v966 = vrot.slane %v956, 5
    %v967 = vrot.slane %v966, 4
    %v968 = vrot.slane %v957, 5
    %v969 = vrot.slane %v968, 4
    %970 = vrot.lane.b32.xlu0 %v963, 126
    %v971 = vpop.permute.xlu0 %970
    %972 = vrot.lane.b32.xlu0 %v965, 126
    %v973 = vpop.permute.xlu0 %972
    %974 = vrot.lane.b32.xlu0 %v967, 126
    %v975 = vpop.permute.xlu0 %974
    %976 = vrot.lane.b32.xlu0 %v969, 126
    %v977 = vpop.permute.xlu0 %976
    %v978 = vrot.slane %v971, 4
    %v979 = vrot.slane %v973, 4
    %v980 = vrot.slane %v975, 4
    %v981 = vrot.slane %v977, 4
    %v982 = vsel %vm89, %v978, %v979
    %v983 = vsel %vm182, %v971, %v982
    %v984 = vsel %vm89, %v980, %v981
    %v985 = vsel %vm182, %v975, %v984
    %v988 = vadd.f32 %v874, %v983
    %v989 = vadd.f32 %v875, %v985
    %s990 = sld [smem:[#allocation2 + $0x26]]
    %v991 = vstv %s990
    %v992 = vmul.f32 %v991, %v39
    %v993 = vmul.f32 %v991, %v40
    %v994 = vmul.f32 %v991, %v41
    %v995 = vmul.f32 %v991, %v42
    %v1000 = vrot.slane %v992, 5
    %v1001 = vrot.slane %v1000, 4
    %v1002 = vrot.slane %v993, 5
    %v1003 = vrot.slane %v1002, 4
    %v1004 = vrot.slane %v994, 5
    %v1005 = vrot.slane %v1004, 4
    %v1006 = vrot.slane %v995, 5
    %v1007 = vrot.slane %v1006, 4
    %1008 = vrot.lane.b32.xlu0 %v1001, 126
    %v1009 = vpop.permute.xlu0 %1008
    %1010 = vrot.lane.b32.xlu0 %v1003, 126
    %v1011 = vpop.permute.xlu0 %1010
    %1012 = vrot.lane.b32.xlu0 %v1005, 126
    %v1013 = vpop.permute.xlu0 %1012
    %1014 = vrot.lane.b32.xlu0 %v1007, 126
    %v1015 = vpop.permute.xlu0 %1014
    %v1016 = vrot.slane %v1009, 4
    %v1017 = vrot.slane %v1011, 4
    %v1018 = vrot.slane %v1013, 4
    %v1019 = vrot.slane %v1015, 4
    %v1020 = vsel %vm89, %v1016, %v1017
    %v1021 = vsel %vm182, %v1009, %v1020
    %v1022 = vsel %vm89, %v1018, %v1019
    %v1023 = vsel %vm182, %v1013, %v1022
    %v1026 = vadd.f32 %v912, %v1021
    %v1027 = vadd.f32 %v913, %v1023
    %s1028 = sld [smem:[#allocation2 + $0x41]]
    %v1029 = vstv %s1028
    %v1030 = vmul.f32 %v1029, %v39
    %v1031 = vmul.f32 %v1029, %v40
    %v1032 = vmul.f32 %v1029, %v41
    %v1033 = vmul.f32 %v1029, %v42
    %v1038 = vrot.slane %v1030, 5
    %v1039 = vrot.slane %v1038, 4
    %v1040 = vrot.slane %v1031, 5
    %v1041 = vrot.slane %v1040, 4
    %v1042 = vrot.slane %v1032, 5
    %v1043 = vrot.slane %v1042, 4
    %v1044 = vrot.slane %v1033, 5
    %v1045 = vrot.slane %v1044, 4
    %1046 = vrot.lane.b32.xlu0 %v1039, 126
    %v1047 = vpop.permute.xlu0 %1046
    %1048 = vrot.lane.b32.xlu0 %v1041, 126
    %v1049 = vpop.permute.xlu0 %1048
    %1050 = vrot.lane.b32.xlu0 %v1043, 126
    %v1051 = vpop.permute.xlu0 %1050
    %1052 = vrot.lane.b32.xlu0 %v1045, 126
    %v1053 = vpop.permute.xlu0 %1052
    %v1054 = vrot.slane %v1047, 4
    %v1055 = vrot.slane %v1049, 4
    %v1056 = vrot.slane %v1051, 4
    %v1057 = vrot.slane %v1053, 4
    %v1058 = vsel %vm89, %v1054, %v1055
    %v1059 = vsel %vm182, %v1047, %v1058
    %v1060 = vsel %vm89, %v1056, %v1057
    %v1061 = vsel %vm182, %v1051, %v1060
    %v1064 = vadd.f32 %v950, %v1059
    %v1065 = vadd.f32 %v951, %v1061
    %s1066 = sld [smem:[#allocation2 + $0xc]]
    %v1067 = vstv %s1066
    %v1068 = vmul.f32 %v1067, %v39
    %v1069 = vmul.f32 %v1067, %v40
    %v1070 = vmul.f32 %v1067, %v41
    %v1071 = vmul.f32 %v1067, %v42
    %v1076 = vrot.slane %v1068, 5
    %v1077 = vrot.slane %v1076, 4
    %v1078 = vrot.slane %v1069, 5
    %v1079 = vrot.slane %v1078, 4
    %v1080 = vrot.slane %v1070, 5
    %v1081 = vrot.slane %v1080, 4
    %v1082 = vrot.slane %v1071, 5
    %v1083 = vrot.slane %v1082, 4
    %1084 = vrot.lane.b32.xlu0 %v1077, 112
    %v1085 = vpop.permute.xlu0 %1084
    %1086 = vrot.lane.b32.xlu0 %v1079, 112
    %v1087 = vpop.permute.xlu0 %1086
    %1088 = vrot.lane.b32.xlu0 %v1081, 112
    %v1089 = vpop.permute.xlu0 %1088
    %1090 = vrot.lane.b32.xlu0 %v1083, 112
    %v1091 = vpop.permute.xlu0 %1090
    %v1092 = vrot.slane %v1085, 4
    %v1093 = vrot.slane %v1087, 4
    %v1094 = vrot.slane %v1089, 4
    %v1095 = vrot.slane %v1091, 4
    %v1096 = vsel %vm89, %v1092, %v1093
    %v1097 = vsel %vm273, %v1085, %v1096
    %v1098 = vsel %vm89, %v1094, %v1095
    %v1099 = vsel %vm273, %v1089, %v1098
    %v1102 = vadd.f32 %v988, %v1097
    %v1103 = vadd.f32 %v989, %v1099
    %s1104 = sld [smem:[#allocation2 + $0x27]]
    %v1105 = vstv %s1104
    %v1106 = vmul.f32 %v1105, %v39
    %v1107 = vmul.f32 %v1105, %v40
    %v1108 = vmul.f32 %v1105, %v41
    %v1109 = vmul.f32 %v1105, %v42
    %v1114 = vrot.slane %v1106, 5
    %v1115 = vrot.slane %v1114, 4
    %v1116 = vrot.slane %v1107, 5
    %v1117 = vrot.slane %v1116, 4
    %v1118 = vrot.slane %v1108, 5
    %v1119 = vrot.slane %v1118, 4
    %v1120 = vrot.slane %v1109, 5
    %v1121 = vrot.slane %v1120, 4
    %1122 = vrot.lane.b32.xlu0 %v1115, 112
    %v1123 = vpop.permute.xlu0 %1122
    %1124 = vrot.lane.b32.xlu0 %v1117, 112
    %v1125 = vpop.permute.xlu0 %1124
    %1126 = vrot.lane.b32.xlu0 %v1119, 112
    %v1127 = vpop.permute.xlu0 %1126
    %1128 = vrot.lane.b32.xlu0 %v1121, 112
    %v1129 = vpop.permute.xlu0 %1128
    %v1130 = vrot.slane %v1123, 4
    %v1131 = vrot.slane %v1125, 4
    %v1132 = vrot.slane %v1127, 4
    %v1133 = vrot.slane %v1129, 4
    %v1134 = vsel %vm89, %v1130, %v1131
    %v1135 = vsel %vm273, %v1123, %v1134
    %v1136 = vsel %vm89, %v1132, %v1133
    %v1137 = vsel %vm273, %v1127, %v1136
    %v1140 = vadd.f32 %v1026, %v1135
    %v1141 = vadd.f32 %v1027, %v1137
    %s1142 = sld [smem:[#allocation2 + $0x42]]
    %v1143 = vstv %s1142
    %v1144 = vmul.f32 %v1143, %v39
    %v1145 = vmul.f32 %v1143, %v40
    %v1146 = vmul.f32 %v1143, %v41
    %v1147 = vmul.f32 %v1143, %v42
    %v1152 = vrot.slane %v1144, 5
    %v1153 = vrot.slane %v1152, 4
    %v1154 = vrot.slane %v1145, 5
    %v1155 = vrot.slane %v1154, 4
    %v1156 = vrot.slane %v1146, 5
    %v1157 = vrot.slane %v1156, 4
    %v1158 = vrot.slane %v1147, 5
    %v1159 = vrot.slane %v1158, 4
    %1160 = vrot.lane.b32.xlu0 %v1153, 112
    %v1161 = vpop.permute.xlu0 %1160
    %1162 = vrot.lane.b32.xlu0 %v1155, 112
    %v1163 = vpop.permute.xlu0 %1162
    %1164 = vrot.lane.b32.xlu0 %v1157, 112
    %v1165 = vpop.permute.xlu0 %1164
    %1166 = vrot.lane.b32.xlu0 %v1159, 112
    %v1167 = vpop.permute.xlu0 %1166
    %v1168 = vrot.slane %v1161, 4
    %v1169 = vrot.slane %v1163, 4
    %v1170 = vrot.slane %v1165, 4
    %v1171 = vrot.slane %v1167, 4
    %v1172 = vsel %vm89, %v1168, %v1169
    %v1173 = vsel %vm273, %v1161, %v1172
    %v1174 = vsel %vm89, %v1170, %v1171
    %v1175 = vsel %vm273, %v1165, %v1174
    %v1178 = vadd.f32 %v1064, %v1173
    %v1179 = vadd.f32 %v1065, %v1175
    %s1180 = sld [smem:[#allocation2 + $0xd]]
    %v1181 = vstv %s1180
    %v1182 = vmul.f32 %v1181, %v39
    %v1183 = vmul.f32 %v1181, %v40
    %v1184 = vmul.f32 %v1181, %v41
    %v1185 = vmul.f32 %v1181, %v42
    %v1190 = vrot.slane %v1182, 5
    %v1191 = vrot.slane %v1190, 4
    %v1192 = vrot.slane %v1183, 5
    %v1193 = vrot.slane %v1192, 4
    %v1194 = vrot.slane %v1184, 5
    %v1195 = vrot.slane %v1194, 4
    %v1196 = vrot.slane %v1185, 5
    %v1197 = vrot.slane %v1196, 4
    %1198 = vrot.lane.b32.xlu0 %v1191, 111
    %v1199 = vpop.permute.xlu0 %1198
    %1200 = vrot.lane.b32.xlu0 %v1193, 111
    %v1201 = vpop.permute.xlu0 %1200
    %1202 = vrot.lane.b32.xlu0 %v1195, 111
    %v1203 = vpop.permute.xlu0 %1202
    %1204 = vrot.lane.b32.xlu0 %v1197, 111
    %v1205 = vpop.permute.xlu0 %1204
    %v1206 = vrot.slane %v1199, 4
    %v1207 = vrot.slane %v1201, 4
    %v1208 = vrot.slane %v1203, 4
    %v1209 = vrot.slane %v1205, 4
    %v1210 = vsel %vm89, %v1206, %v1207
    %v1211 = vsel %vm364, %v1199, %v1210
    %v1212 = vsel %vm89, %v1208, %v1209
    %v1213 = vsel %vm364, %v1203, %v1212
    %v1216 = vadd.f32 %v1102, %v1211
    %v1217 = vadd.f32 %v1103, %v1213
    %s1218 = sld [smem:[#allocation2 + $0x28]]
    %v1219 = vstv %s1218
    %v1220 = vmul.f32 %v1219, %v39
    %v1221 = vmul.f32 %v1219, %v40
    %v1222 = vmul.f32 %v1219, %v41
    %v1223 = vmul.f32 %v1219, %v42
    %v1228 = vrot.slane %v1220, 5
    %v1229 = vrot.slane %v1228, 4
    %v1230 = vrot.slane %v1221, 5
    %v1231 = vrot.slane %v1230, 4
    %v1232 = vrot.slane %v1222, 5
    %v1233 = vrot.slane %v1232, 4
    %v1234 = vrot.slane %v1223, 5
    %v1235 = vrot.slane %v1234, 4
    %1236 = vrot.lane.b32.xlu0 %v1229, 111
    %v1237 = vpop.permute.xlu0 %1236
    %1238 = vrot.lane.b32.xlu0 %v1231, 111
    %v1239 = vpop.permute.xlu0 %1238
    %1240 = vrot.lane.b32.xlu0 %v1233, 111
    %v1241 = vpop.permute.xlu0 %1240
    %1242 = vrot.lane.b32.xlu0 %v1235, 111
    %v1243 = vpop.permute.xlu0 %1242
    %v1244 = vrot.slane %v1237, 4
    %v1245 = vrot.slane %v1239, 4
    %v1246 = vrot.slane %v1241, 4
    %v1247 = vrot.slane %v1243, 4
    %v1248 = vsel %vm89, %v1244, %v1245
    %v1249 = vsel %vm364, %v1237, %v1248
    %v1250 = vsel %vm89, %v1246, %v1247
    %v1251 = vsel %vm364, %v1241, %v1250
    %v1254 = vadd.f32 %v1140, %v1249
    %v1255 = vadd.f32 %v1141, %v1251
    %s1256 = sld [smem:[#allocation2 + $0x43]]
    %v1257 = vstv %s1256
    %v1258 = vmul.f32 %v1257, %v39
    %v1259 = vmul.f32 %v1257, %v40
    %v1260 = vmul.f32 %v1257, %v41
    %v1261 = vmul.f32 %v1257, %v42
    %v1266 = vrot.slane %v1258, 5
    %v1267 = vrot.slane %v1266, 4
    %v1268 = vrot.slane %v1259, 5
    %v1269 = vrot.slane %v1268, 4
    %v1270 = vrot.slane %v1260, 5
    %v1271 = vrot.slane %v1270, 4
    %v1272 = vrot.slane %v1261, 5
    %v1273 = vrot.slane %v1272, 4
    %1274 = vrot.lane.b32.xlu0 %v1267, 111
    %v1275 = vpop.permute.xlu0 %1274
    %1276 = vrot.lane.b32.xlu0 %v1269, 111
    %v1277 = vpop.permute.xlu0 %1276
    %1278 = vrot.lane.b32.xlu0 %v1271, 111
    %v1279 = vpop.permute.xlu0 %1278
    %1280 = vrot.lane.b32.xlu0 %v1273, 111
    %v1281 = vpop.permute.xlu0 %1280
    %v1282 = vrot.slane %v1275, 4
    %v1283 = vrot.slane %v1277, 4
    %v1284 = vrot.slane %v1279, 4
    %v1285 = vrot.slane %v1281, 4
    %v1286 = vsel %vm89, %v1282, %v1283
    %v1287 = vsel %vm364, %v1275, %v1286
    %v1288 = vsel %vm89, %v1284, %v1285
    %v1289 = vsel %vm364, %v1279, %v1288
    %v1292 = vadd.f32 %v1178, %v1287
    %v1293 = vadd.f32 %v1179, %v1289
    %s1294 = sld [smem:[#allocation2 + $0xe]]
    %v1295 = vstv %s1294
    %v1296 = vmul.f32 %v1295, %v39
    %v1297 = vmul.f32 %v1295, %v40
    %v1298 = vmul.f32 %v1295, %v41
    %v1299 = vmul.f32 %v1295, %v42
    %v1304 = vrot.slane %v1296, 5
    %v1305 = vrot.slane %v1304, 4
    %v1306 = vrot.slane %v1297, 5
    %v1307 = vrot.slane %v1306, 4
    %v1308 = vrot.slane %v1298, 5
    %v1309 = vrot.slane %v1308, 4
    %v1310 = vrot.slane %v1299, 5
    %v1311 = vrot.slane %v1310, 4
    %1312 = vrot.lane.b32.xlu0 %v1305, 110
    %v1313 = vpop.permute.xlu0 %1312
    %1314 = vrot.lane.b32.xlu0 %v1307, 110
    %v1315 = vpop.permute.xlu0 %1314
    %1316 = vrot.lane.b32.xlu0 %v1309, 110
    %v1317 = vpop.permute.xlu0 %1316
    %1318 = vrot.lane.b32.xlu0 %v1311, 110
    %v1319 = vpop.permute.xlu0 %1318
    %v1320 = vrot.slane %v1313, 4
    %v1321 = vrot.slane %v1315, 4
    %v1322 = vrot.slane %v1317, 4
    %v1323 = vrot.slane %v1319, 4
    %v1324 = vsel %vm89, %v1320, %v1321
    %v1325 = vsel %vm455, %v1313, %v1324
    %v1326 = vsel %vm89, %v1322, %v1323
    %v1327 = vsel %vm455, %v1317, %v1326
    %v1330 = vadd.f32 %v1216, %v1325
    %v1331 = vadd.f32 %v1217, %v1327
    %s1332 = sld [smem:[#allocation2 + $0x29]]
    %v1333 = vstv %s1332
    %v1334 = vmul.f32 %v1333, %v39
    %v1335 = vmul.f32 %v1333, %v40
    %v1336 = vmul.f32 %v1333, %v41
    %v1337 = vmul.f32 %v1333, %v42
    %v1342 = vrot.slane %v1334, 5
    %v1343 = vrot.slane %v1342, 4
    %v1344 = vrot.slane %v1335, 5
    %v1345 = vrot.slane %v1344, 4
    %v1346 = vrot.slane %v1336, 5
    %v1347 = vrot.slane %v1346, 4
    %v1348 = vrot.slane %v1337, 5
    %v1349 = vrot.slane %v1348, 4
    %1350 = vrot.lane.b32.xlu0 %v1343, 110
    %v1351 = vpop.permute.xlu0 %1350
    %1352 = vrot.lane.b32.xlu0 %v1345, 110
    %v1353 = vpop.permute.xlu0 %1352
    %1354 = vrot.lane.b32.xlu0 %v1347, 110
    %v1355 = vpop.permute.xlu0 %1354
    %1356 = vrot.lane.b32.xlu0 %v1349, 110
    %v1357 = vpop.permute.xlu0 %1356
    %v1358 = vrot.slane %v1351, 4
    %v1359 = vrot.slane %v1353, 4
    %v1360 = vrot.slane %v1355, 4
    %v1361 = vrot.slane %v1357, 4
    %v1362 = vsel %vm89, %v1358, %v1359
    %v1363 = vsel %vm455, %v1351, %v1362
    %v1364 = vsel %vm89, %v1360, %v1361
    %v1365 = vsel %vm455, %v1355, %v1364
    %v1368 = vadd.f32 %v1254, %v1363
    %v1369 = vadd.f32 %v1255, %v1365
    %s1370 = sld [smem:[#allocation2 + $0x44]]
    %v1371 = vstv %s1370
    %v1372 = vmul.f32 %v1371, %v39
    %v1373 = vmul.f32 %v1371, %v40
    %v1374 = vmul.f32 %v1371, %v41
    %v1375 = vmul.f32 %v1371, %v42
    %v1380 = vrot.slane %v1372, 5
    %v1381 = vrot.slane %v1380, 4
    %v1382 = vrot.slane %v1373, 5
    %v1383 = vrot.slane %v1382, 4
    %v1384 = vrot.slane %v1374, 5
    %v1385 = vrot.slane %v1384, 4
    %v1386 = vrot.slane %v1375, 5
    %v1387 = vrot.slane %v1386, 4
    %1388 = vrot.lane.b32.xlu0 %v1381, 110
    %v1389 = vpop.permute.xlu0 %1388
    %1390 = vrot.lane.b32.xlu0 %v1383, 110
    %v1391 = vpop.permute.xlu0 %1390
    %1392 = vrot.lane.b32.xlu0 %v1385, 110
    %v1393 = vpop.permute.xlu0 %1392
    %1394 = vrot.lane.b32.xlu0 %v1387, 110
    %v1395 = vpop.permute.xlu0 %1394
    %v1396 = vrot.slane %v1389, 4
    %v1397 = vrot.slane %v1391, 4
    %v1398 = vrot.slane %v1393, 4
    %v1399 = vrot.slane %v1395, 4
    %v1400 = vsel %vm89, %v1396, %v1397
    %v1401 = vsel %vm455, %v1389, %v1400
    %v1402 = vsel %vm89, %v1398, %v1399
    %v1403 = vsel %vm455, %v1393, %v1402
    %v1406 = vadd.f32 %v1292, %v1401
    %v1407 = vadd.f32 %v1293, %v1403
    %s1408 = sld [smem:[#allocation2 + $0xf]]
    %v1409 = vstv %s1408
    %v1410 = vmul.f32 %v1409, %v39
    %v1411 = vmul.f32 %v1409, %v40
    %v1412 = vmul.f32 %v1409, %v41
    %v1413 = vmul.f32 %v1409, %v42
    %v1418 = vrot.slane %v1410, 5
    %v1419 = vrot.slane %v1418, 4
    %v1420 = vrot.slane %v1411, 5
    %v1421 = vrot.slane %v1420, 4
    %v1422 = vrot.slane %v1412, 5
    %v1423 = vrot.slane %v1422, 4
    %v1424 = vrot.slane %v1413, 5
    %v1425 = vrot.slane %v1424, 4
    %1426 = vrot.lane.b32.xlu0 %v1419, 96
    %v1427 = vpop.permute.xlu0 %1426
    %1428 = vrot.lane.b32.xlu0 %v1421, 96
    %v1429 = vpop.permute.xlu0 %1428
    %1430 = vrot.lane.b32.xlu0 %v1423, 96
    %v1431 = vpop.permute.xlu0 %1430
    %1432 = vrot.lane.b32.xlu0 %v1425, 96
    %v1433 = vpop.permute.xlu0 %1432
    %v1434 = vrot.slane %v1427, 4
    %v1435 = vrot.slane %v1429, 4
    %v1436 = vrot.slane %v1431, 4
    %v1437 = vrot.slane %v1433, 4
    %v1438 = vsel %vm89, %v1434, %v1435
    %v1439 = vsel %vm546, %v1427, %v1438
    %v1440 = vsel %vm89, %v1436, %v1437
    %v1441 = vsel %vm546, %v1431, %v1440
    %v1444 = vadd.f32 %v1330, %v1439
    %v1445 = vadd.f32 %v1331, %v1441
    %s1446 = sld [smem:[#allocation2 + $0x2a]]
    %v1447 = vstv %s1446
    %v1448 = vmul.f32 %v1447, %v39
    %v1449 = vmul.f32 %v1447, %v40
    %v1450 = vmul.f32 %v1447, %v41
    %v1451 = vmul.f32 %v1447, %v42
    %v1456 = vrot.slane %v1448, 5
    %v1457 = vrot.slane %v1456, 4
    %v1458 = vrot.slane %v1449, 5
    %v1459 = vrot.slane %v1458, 4
    %v1460 = vrot.slane %v1450, 5
    %v1461 = vrot.slane %v1460, 4
    %v1462 = vrot.slane %v1451, 5
    %v1463 = vrot.slane %v1462, 4
    %1464 = vrot.lane.b32.xlu0 %v1457, 96
    %v1465 = vpop.permute.xlu0 %1464
    %1466 = vrot.lane.b32.xlu0 %v1459, 96
    %v1467 = vpop.permute.xlu0 %1466
    %1468 = vrot.lane.b32.xlu0 %v1461, 96
    %v1469 = vpop.permute.xlu0 %1468
    %1470 = vrot.lane.b32.xlu0 %v1463, 96
    %v1471 = vpop.permute.xlu0 %1470
    %v1472 = vrot.slane %v1465, 4
    %v1473 = vrot.slane %v1467, 4
    %v1474 = vrot.slane %v1469, 4
    %v1475 = vrot.slane %v1471, 4
    %v1476 = vsel %vm89, %v1472, %v1473
    %v1477 = vsel %vm546, %v1465, %v1476
    %v1478 = vsel %vm89, %v1474, %v1475
    %v1479 = vsel %vm546, %v1469, %v1478
    %v1482 = vadd.f32 %v1368, %v1477
    %v1483 = vadd.f32 %v1369, %v1479
    %s1484 = sld [smem:[#allocation2 + $0x45]]
    %v1485 = vstv %s1484
    %v1486 = vmul.f32 %v1485, %v39
    %v1487 = vmul.f32 %v1485, %v40
    %v1488 = vmul.f32 %v1485, %v41
    %v1489 = vmul.f32 %v1485, %v42
    %v1494 = vrot.slane %v1486, 5
    %v1495 = vrot.slane %v1494, 4
    %v1496 = vrot.slane %v1487, 5
    %v1497 = vrot.slane %v1496, 4
    %v1498 = vrot.slane %v1488, 5
    %v1499 = vrot.slane %v1498, 4
    %v1500 = vrot.slane %v1489, 5
    %v1501 = vrot.slane %v1500, 4
    %1502 = vrot.lane.b32.xlu0 %v1495, 96
    %v1503 = vpop.permute.xlu0 %1502
    %1504 = vrot.lane.b32.xlu0 %v1497, 96
    %v1505 = vpop.permute.xlu0 %1504
    %1506 = vrot.lane.b32.xlu0 %v1499, 96
    %v1507 = vpop.permute.xlu0 %1506
    %1508 = vrot.lane.b32.xlu0 %v1501, 96
    %v1509 = vpop.permute.xlu0 %1508
    %v1510 = vrot.slane %v1503, 4
    %v1511 = vrot.slane %v1505, 4
    %v1512 = vrot.slane %v1507, 4
    %v1513 = vrot.slane %v1509, 4
    %v1514 = vsel %vm89, %v1510, %v1511
    %v1515 = vsel %vm546, %v1503, %v1514
    %v1516 = vsel %vm89, %v1512, %v1513
    %v1517 = vsel %vm546, %v1507, %v1516
    %v1520 = vadd.f32 %v1406, %v1515
    %v1521 = vadd.f32 %v1407, %v1517
    %s1522 = sld [smem:[#allocation2 + $0x10]]
    %v1523 = vstv %s1522
    %v1524 = vmul.f32 %v1523, %v39
    %v1525 = vmul.f32 %v1523, %v40
    %v1526 = vmul.f32 %v1523, %v41
    %v1527 = vmul.f32 %v1523, %v42
    %v1532 = vrot.slane %v1524, 5
    %v1533 = vrot.slane %v1532, 4
    %v1534 = vrot.slane %v1525, 5
    %v1535 = vrot.slane %v1534, 4
    %v1536 = vrot.slane %v1526, 5
    %v1537 = vrot.slane %v1536, 4
    %v1538 = vrot.slane %v1527, 5
    %v1539 = vrot.slane %v1538, 4
    %1540 = vrot.lane.b32.xlu0 %v1533, 95
    %v1541 = vpop.permute.xlu0 %1540
    %1542 = vrot.lane.b32.xlu0 %v1535, 95
    %v1543 = vpop.permute.xlu0 %1542
    %1544 = vrot.lane.b32.xlu0 %v1537, 95
    %v1545 = vpop.permute.xlu0 %1544
    %1546 = vrot.lane.b32.xlu0 %v1539, 95
    %v1547 = vpop.permute.xlu0 %1546
    %v1548 = vrot.slane %v1541, 4
    %v1549 = vrot.slane %v1543, 4
    %v1550 = vrot.slane %v1545, 4
    %v1551 = vrot.slane %v1547, 4
    %v1552 = vsel %vm89, %v1548, %v1549
    %v1553 = vsel %vm637, %v1541, %v1552
    %v1554 = vsel %vm89, %v1550, %v1551
    %v1555 = vsel %vm637, %v1545, %v1554
    %v1558 = vadd.f32 %v1444, %v1553
    %v1559 = vadd.f32 %v1445, %v1555
    %s1560 = sld [smem:[#allocation2 + $0x2b]]
    %v1561 = vstv %s1560
    %v1562 = vmul.f32 %v1561, %v39
    %v1563 = vmul.f32 %v1561, %v40
    %v1564 = vmul.f32 %v1561, %v41
    %v1565 = vmul.f32 %v1561, %v42
    %v1570 = vrot.slane %v1562, 5
    %v1571 = vrot.slane %v1570, 4
    %v1572 = vrot.slane %v1563, 5
    %v1573 = vrot.slane %v1572, 4
    %v1574 = vrot.slane %v1564, 5
    %v1575 = vrot.slane %v1574, 4
    %v1576 = vrot.slane %v1565, 5
    %v1577 = vrot.slane %v1576, 4
    %1578 = vrot.lane.b32.xlu0 %v1571, 95
    %v1579 = vpop.permute.xlu0 %1578
    %1580 = vrot.lane.b32.xlu0 %v1573, 95
    %v1581 = vpop.permute.xlu0 %1580
    %1582 = vrot.lane.b32.xlu0 %v1575, 95
    %v1583 = vpop.permute.xlu0 %1582
    %1584 = vrot.lane.b32.xlu0 %v1577, 95
    %v1585 = vpop.permute.xlu0 %1584
    %v1586 = vrot.slane %v1579, 4
    %v1587 = vrot.slane %v1581, 4
    %v1588 = vrot.slane %v1583, 4
    %v1589 = vrot.slane %v1585, 4
    %v1590 = vsel %vm89, %v1586, %v1587
    %v1591 = vsel %vm637, %v1579, %v1590
    %v1592 = vsel %vm89, %v1588, %v1589
    %v1593 = vsel %vm637, %v1583, %v1592
    %v1596 = vadd.f32 %v1482, %v1591
    %v1597 = vadd.f32 %v1483, %v1593
    %s1598 = sld [smem:[#allocation2 + $0x46]]
    %v1599 = vstv %s1598
    %v1600 = vmul.f32 %v1599, %v39
    %v1601 = vmul.f32 %v1599, %v40
    %v1602 = vmul.f32 %v1599, %v41
    %v1603 = vmul.f32 %v1599, %v42
    %v1608 = vrot.slane %v1600, 5
    %v1609 = vrot.slane %v1608, 4
    %v1610 = vrot.slane %v1601, 5
    %v1611 = vrot.slane %v1610, 4
    %v1612 = vrot.slane %v1602, 5
    %v1613 = vrot.slane %v1612, 4
    %v1614 = vrot.slane %v1603, 5
    %v1615 = vrot.slane %v1614, 4
    %1616 = vrot.lane.b32.xlu0 %v1609, 95
    %v1617 = vpop.permute.xlu0 %1616
    %1618 = vrot.lane.b32.xlu0 %v1611, 95
    %v1619 = vpop.permute.xlu0 %1618
    %1620 = vrot.lane.b32.xlu0 %v1613, 95
    %v1621 = vpop.permute.xlu0 %1620
    %1622 = vrot.lane.b32.xlu0 %v1615, 95
    %v1623 = vpop.permute.xlu0 %1622
    %v1624 = vrot.slane %v1617, 4
    %v1625 = vrot.slane %v1619, 4
    %v1626 = vrot.slane %v1621, 4
    %v1627 = vrot.slane %v1623, 4
    %v1628 = vsel %vm89, %v1624, %v1625
    %v1629 = vsel %vm637, %v1617, %v1628
    %v1630 = vsel %vm89, %v1626, %v1627
    %v1631 = vsel %vm637, %v1621, %v1630
    %v1634 = vadd.f32 %v1520, %v1629
    %v1635 = vadd.f32 %v1521, %v1631
    %s1636 = sld [smem:[#allocation2 + $0x11]]
    %v1637 = vstv %s1636
    %v1638 = vmul.f32 %v1637, %v39
    %v1639 = vmul.f32 %v1637, %v40
    %v1640 = vmul.f32 %v1637, %v41
    %v1641 = vmul.f32 %v1637, %v42
    %v1646 = vrot.slane %v1638, 5
    %v1647 = vrot.slane %v1646, 4
    %v1648 = vrot.slane %v1639, 5
    %v1649 = vrot.slane %v1648, 4
    %v1650 = vrot.slane %v1640, 5
    %v1651 = vrot.slane %v1650, 4
    %v1652 = vrot.slane %v1641, 5
    %v1653 = vrot.slane %v1652, 4
    %1654 = vrot.lane.b32.xlu0 %v1647, 94
    %v1655 = vpop.permute.xlu0 %1654
    %1656 = vrot.lane.b32.xlu0 %v1649, 94
    %v1657 = vpop.permute.xlu0 %1656
    %1658 = vrot.lane.b32.xlu0 %v1651, 94
    %v1659 = vpop.permute.xlu0 %1658
    %1660 = vrot.lane.b32.xlu0 %v1653, 94
    %v1661 = vpop.permute.xlu0 %1660
    %v1662 = vrot.slane %v1655, 4
    %v1663 = vrot.slane %v1657, 4
    %v1664 = vrot.slane %v1659, 4
    %v1665 = vrot.slane %v1661, 4
    %v1666 = vsel %vm89, %v1662, %v1663
    %v1667 = vsel %vm728, %v1655, %v1666
    %v1668 = vsel %vm89, %v1664, %v1665
    %v1669 = vsel %vm728, %v1659, %v1668
    %v1672 = vadd.f32 %v1558, %v1667
    %v1673 = vadd.f32 %v1559, %v1669
    %s1674 = sld [smem:[#allocation2 + $0x2c]]
    %v1675 = vstv %s1674
    %v1676 = vmul.f32 %v1675, %v39
    %v1677 = vmul.f32 %v1675, %v40
    %v1678 = vmul.f32 %v1675, %v41
    %v1679 = vmul.f32 %v1675, %v42
    %v1684 = vrot.slane %v1676, 5
    %v1685 = vrot.slane %v1684, 4
    %v1686 = vrot.slane %v1677, 5
    %v1687 = vrot.slane %v1686, 4
    %v1688 = vrot.slane %v1678, 5
    %v1689 = vrot.slane %v1688, 4
    %v1690 = vrot.slane %v1679, 5
    %v1691 = vrot.slane %v1690, 4
    %1692 = vrot.lane.b32.xlu0 %v1685, 94
    %v1693 = vpop.permute.xlu0 %1692
    %1694 = vrot.lane.b32.xlu0 %v1687, 94
    %v1695 = vpop.permute.xlu0 %1694
    %1696 = vrot.lane.b32.xlu0 %v1689, 94
    %v1697 = vpop.permute.xlu0 %1696
    %1698 = vrot.lane.b32.xlu0 %v1691, 94
    %v1699 = vpop.permute.xlu0 %1698
    %v1700 = vrot.slane %v1693, 4
    %v1701 = vrot.slane %v1695, 4
    %v1702 = vrot.slane %v1697, 4
    %v1703 = vrot.slane %v1699, 4
    %v1704 = vsel %vm89, %v1700, %v1701
    %v1705 = vsel %vm728, %v1693, %v1704
    %v1706 = vsel %vm89, %v1702, %v1703
    %v1707 = vsel %vm728, %v1697, %v1706
    %v1710 = vadd.f32 %v1596, %v1705
    %v1711 = vadd.f32 %v1597, %v1707
    %s1712 = sld [smem:[#allocation2 + $0x47]]
    %v1713 = vstv %s1712
    %v1714 = vmul.f32 %v1713, %v39
    %v1715 = vmul.f32 %v1713, %v40
    %v1716 = vmul.f32 %v1713, %v41
    %v1717 = vmul.f32 %v1713, %v42
    %v1722 = vrot.slane %v1714, 5
    %v1723 = vrot.slane %v1722, 4
    %v1724 = vrot.slane %v1715, 5
    %v1725 = vrot.slane %v1724, 4
    %v1726 = vrot.slane %v1716, 5
    %v1727 = vrot.slane %v1726, 4
    %v1728 = vrot.slane %v1717, 5
    %v1729 = vrot.slane %v1728, 4
    %1730 = vrot.lane.b32.xlu0 %v1723, 94
    %v1731 = vpop.permute.xlu0 %1730
    %1732 = vrot.lane.b32.xlu0 %v1725, 94
    %v1733 = vpop.permute.xlu0 %1732
    %1734 = vrot.lane.b32.xlu0 %v1727, 94
    %v1735 = vpop.permute.xlu0 %1734
    %1736 = vrot.lane.b32.xlu0 %v1729, 94
    %v1737 = vpop.permute.xlu0 %1736
    %v1738 = vrot.slane %v1731, 4
    %v1739 = vrot.slane %v1733, 4
    %v1740 = vrot.slane %v1735, 4
    %v1741 = vrot.slane %v1737, 4
    %v1742 = vsel %vm89, %v1738, %v1739
    %v1743 = vsel %vm728, %v1731, %v1742
    %v1744 = vsel %vm89, %v1740, %v1741
    %v1745 = vsel %vm728, %v1735, %v1744
    %v1748 = vadd.f32 %v1634, %v1743
    %v1749 = vadd.f32 %v1635, %v1745
    %s1750 = sld [smem:[#allocation2 + $0x12]]
    %v1751 = vstv %s1750
    %v1752 = vmul.f32 %v1751, %v39
    %v1753 = vmul.f32 %v1751, %v41
    %v1756 = vrot.slane %v1752, 6
    %v1757 = vrot.slane %v1756, 4
    %v1758 = vrot.slane %v1753, 6
    %v1759 = vrot.slane %v1758, 4
    %v1762 = vadd.f32 %v1672, %v1757
    %v1763 = vadd.f32 %v1673, %v1759
    %s1764 = sld [smem:[#allocation2 + $0x2d]]
    %v1765 = vstv %s1764
    %v1766 = vmul.f32 %v1765, %v39
    %v1767 = vmul.f32 %v1765, %v41
    %v1770 = vrot.slane %v1766, 6
    %v1771 = vrot.slane %v1770, 4
    %v1772 = vrot.slane %v1767, 6
    %v1773 = vrot.slane %v1772, 4
    %v1776 = vadd.f32 %v1710, %v1771
    %v1777 = vadd.f32 %v1711, %v1773
    %s1778 = sld [smem:[#allocation2 + $0x48]]
    %v1779 = vstv %s1778
    %v1780 = vmul.f32 %v1779, %v39
    %v1781 = vmul.f32 %v1779, %v41
    %v1784 = vrot.slane %v1780, 6
    %v1785 = vrot.slane %v1784, 4
    %v1786 = vrot.slane %v1781, 6
    %v1787 = vrot.slane %v1786, 4
    %v1790 = vadd.f32 %v1748, %v1785
    %v1791 = vadd.f32 %v1749, %v1787
    %s1792 = sld [smem:[#allocation2 + $0x13]]
    %v1793 = vstv %s1792
    %v1794 = vmul.f32 %v1793, %v39
    %v1795 = vmul.f32 %v1793, %v40
    %v1796 = vmul.f32 %v1793, %v41
    %v1797 = vmul.f32 %v1793, %v42
    %v1802 = vrot.slane %v1794, 6
    %v1803 = vrot.slane %v1802, 4
    %v1804 = vrot.slane %v1795, 6
    %v1805 = vrot.slane %v1804, 4
    %v1806 = vrot.slane %v1796, 6
    %v1807 = vrot.slane %v1806, 4
    %v1808 = vrot.slane %v1797, 6
    %v1809 = vrot.slane %v1808, 4
    %1810 = vrot.lane.b32.xlu0 %v1803, 127
    %v1811 = vpop.permute.xlu0 %1810
    %1812 = vrot.lane.b32.xlu0 %v1805, 127
    %v1813 = vpop.permute.xlu0 %1812
    %1814 = vrot.lane.b32.xlu0 %v1807, 127
    %v1815 = vpop.permute.xlu0 %1814
    %1816 = vrot.lane.b32.xlu0 %v1809, 127
    %v1817 = vpop.permute.xlu0 %1816
    %v1818 = vrot.slane %v1811, 4
    %v1819 = vrot.slane %v1813, 4
    %v1820 = vrot.slane %v1815, 4
    %v1821 = vrot.slane %v1817, 4
    %v1822 = vsel %vm89, %v1818, %v1819
    %v1823 = vsel %vm91, %v1811, %v1822
    %v1824 = vsel %vm89, %v1820, %v1821
    %v1825 = vsel %vm91, %v1815, %v1824
    %v1828 = vadd.f32 %v1762, %v1823
    %v1829 = vadd.f32 %v1763, %v1825
    %s1830 = sld [smem:[#allocation2 + $0x2e]]
    %v1831 = vstv %s1830
    %v1832 = vmul.f32 %v1831, %v39
    %v1833 = vmul.f32 %v1831, %v40
    %v1834 = vmul.f32 %v1831, %v41
    %v1835 = vmul.f32 %v1831, %v42
    %v1840 = vrot.slane %v1832, 6
    %v1841 = vrot.slane %v1840, 4
    %v1842 = vrot.slane %v1833, 6
    %v1843 = vrot.slane %v1842, 4
    %v1844 = vrot.slane %v1834, 6
    %v1845 = vrot.slane %v1844, 4
    %v1846 = vrot.slane %v1835, 6
    %v1847 = vrot.slane %v1846, 4
    %1848 = vrot.lane.b32.xlu0 %v1841, 127
    %v1849 = vpop.permute.xlu0 %1848
    %1850 = vrot.lane.b32.xlu0 %v1843, 127
    %v1851 = vpop.permute.xlu0 %1850
    %1852 = vrot.lane.b32.xlu0 %v1845, 127
    %v1853 = vpop.permute.xlu0 %1852
    %1854 = vrot.lane.b32.xlu0 %v1847, 127
    %v1855 = vpop.permute.xlu0 %1854
    %v1856 = vrot.slane %v1849, 4
    %v1857 = vrot.slane %v1851, 4
    %v1858 = vrot.slane %v1853, 4
    %v1859 = vrot.slane %v1855, 4
    %v1860 = vsel %vm89, %v1856, %v1857
    %v1861 = vsel %vm91, %v1849, %v1860
    %v1862 = vsel %vm89, %v1858, %v1859
    %v1863 = vsel %vm91, %v1853, %v1862
    %v1866 = vadd.f32 %v1776, %v1861
    %v1867 = vadd.f32 %v1777, %v1863
    %s1868 = sld [smem:[#allocation2 + $0x49]]
    %v1869 = vstv %s1868
    %v1870 = vmul.f32 %v1869, %v39
    %v1871 = vmul.f32 %v1869, %v40
    %v1872 = vmul.f32 %v1869, %v41
    %v1873 = vmul.f32 %v1869, %v42
    %v1878 = vrot.slane %v1870, 6
    %v1879 = vrot.slane %v1878, 4
    %v1880 = vrot.slane %v1871, 6
    %v1881 = vrot.slane %v1880, 4
    %v1882 = vrot.slane %v1872, 6
    %v1883 = vrot.slane %v1882, 4
    %v1884 = vrot.slane %v1873, 6
    %v1885 = vrot.slane %v1884, 4
    %1886 = vrot.lane.b32.xlu0 %v1879, 127
    %v1887 = vpop.permute.xlu0 %1886
    %1888 = vrot.lane.b32.xlu0 %v1881, 127
    %v1889 = vpop.permute.xlu0 %1888
    %1890 = vrot.lane.b32.xlu0 %v1883, 127
    %v1891 = vpop.permute.xlu0 %1890
    %1892 = vrot.lane.b32.xlu0 %v1885, 127
    %v1893 = vpop.permute.xlu0 %1892
    %v1894 = vrot.slane %v1887, 4
    %v1895 = vrot.slane %v1889, 4
    %v1896 = vrot.slane %v1891, 4
    %v1897 = vrot.slane %v1893, 4
    %v1898 = vsel %vm89, %v1894, %v1895
    %v1899 = vsel %vm91, %v1887, %v1898
    %v1900 = vsel %vm89, %v1896, %v1897
    %v1901 = vsel %vm91, %v1891, %v1900
    %v1904 = vadd.f32 %v1790, %v1899
    %v1905 = vadd.f32 %v1791, %v1901
    %s1906 = sld [smem:[#allocation2 + $0x14]]
    %v1907 = vstv %s1906
    %v1908 = vmul.f32 %v1907, %v39
    %v1909 = vmul.f32 %v1907, %v40
    %v1910 = vmul.f32 %v1907, %v41
    %v1911 = vmul.f32 %v1907, %v42
    %v1916 = vrot.slane %v1908, 6
    %v1917 = vrot.slane %v1916, 4
    %v1918 = vrot.slane %v1909, 6
    %v1919 = vrot.slane %v1918, 4
    %v1920 = vrot.slane %v1910, 6
    %v1921 = vrot.slane %v1920, 4
    %v1922 = vrot.slane %v1911, 6
    %v1923 = vrot.slane %v1922, 4
    %1924 = vrot.lane.b32.xlu0 %v1917, 126
    %v1925 = vpop.permute.xlu0 %1924
    %1926 = vrot.lane.b32.xlu0 %v1919, 126
    %v1927 = vpop.permute.xlu0 %1926
    %1928 = vrot.lane.b32.xlu0 %v1921, 126
    %v1929 = vpop.permute.xlu0 %1928
    %1930 = vrot.lane.b32.xlu0 %v1923, 126
    %v1931 = vpop.permute.xlu0 %1930
    %v1932 = vrot.slane %v1925, 4
    %v1933 = vrot.slane %v1927, 4
    %v1934 = vrot.slane %v1929, 4
    %v1935 = vrot.slane %v1931, 4
    %v1936 = vsel %vm89, %v1932, %v1933
    %v1937 = vsel %vm182, %v1925, %v1936
    %v1938 = vsel %vm89, %v1934, %v1935
    %v1939 = vsel %vm182, %v1929, %v1938
    %v1942 = vadd.f32 %v1828, %v1937
    %v1943 = vadd.f32 %v1829, %v1939
    %s1944 = sld [smem:[#allocation2 + $0x2f]]
    %v1945 = vstv %s1944
    %v1946 = vmul.f32 %v1945, %v39
    %v1947 = vmul.f32 %v1945, %v40
    %v1948 = vmul.f32 %v1945, %v41
    %v1949 = vmul.f32 %v1945, %v42
    %v1954 = vrot.slane %v1946, 6
    %v1955 = vrot.slane %v1954, 4
    %v1956 = vrot.slane %v1947, 6
    %v1957 = vrot.slane %v1956, 4
    %v1958 = vrot.slane %v1948, 6
    %v1959 = vrot.slane %v1958, 4
    %v1960 = vrot.slane %v1949, 6
    %v1961 = vrot.slane %v1960, 4
    %1962 = vrot.lane.b32.xlu0 %v1955, 126
    %v1963 = vpop.permute.xlu0 %1962
    %1964 = vrot.lane.b32.xlu0 %v1957, 126
    %v1965 = vpop.permute.xlu0 %1964
    %1966 = vrot.lane.b32.xlu0 %v1959, 126
    %v1967 = vpop.permute.xlu0 %1966
    %1968 = vrot.lane.b32.xlu0 %v1961, 126
    %v1969 = vpop.permute.xlu0 %1968
    %v1970 = vrot.slane %v1963, 4
    %v1971 = vrot.slane %v1965, 4
    %v1972 = vrot.slane %v1967, 4
    %v1973 = vrot.slane %v1969, 4
    %v1974 = vsel %vm89, %v1970, %v1971
    %v1975 = vsel %vm182, %v1963, %v1974
    %v1976 = vsel %vm89, %v1972, %v1973
    %v1977 = vsel %vm182, %v1967, %v1976
    %v1980 = vadd.f32 %v1866, %v1975
    %v1981 = vadd.f32 %v1867, %v1977
    %s1982 = sld [smem:[#allocation2 + $0x4a]]
    %v1983 = vstv %s1982
    %v1984 = vmul.f32 %v1983, %v39
    %v1985 = vmul.f32 %v1983, %v40
    %v1986 = vmul.f32 %v1983, %v41
    %v1987 = vmul.f32 %v1983, %v42
    %v1992 = vrot.slane %v1984, 6
    %v1993 = vrot.slane %v1992, 4
    %v1994 = vrot.slane %v1985, 6
    %v1995 = vrot.slane %v1994, 4
    %v1996 = vrot.slane %v1986, 6
    %v1997 = vrot.slane %v1996, 4
    %v1998 = vrot.slane %v1987, 6
    %v1999 = vrot.slane %v1998, 4
    %2000 = vrot.lane.b32.xlu0 %v1993, 126
    %v2001 = vpop.permute.xlu0 %2000
    %2002 = vrot.lane.b32.xlu0 %v1995, 126
    %v2003 = vpop.permute.xlu0 %2002
    %2004 = vrot.lane.b32.xlu0 %v1997, 126
    %v2005 = vpop.permute.xlu0 %2004
    %2006 = vrot.lane.b32.xlu0 %v1999, 126
    %v2007 = vpop.permute.xlu0 %2006
    %v2008 = vrot.slane %v2001, 4
    %v2009 = vrot.slane %v2003, 4
    %v2010 = vrot.slane %v2005, 4
    %v2011 = vrot.slane %v2007, 4
    %v2012 = vsel %vm89, %v2008, %v2009
    %v2013 = vsel %vm182, %v2001, %v2012
    %v2014 = vsel %vm89, %v2010, %v2011
    %v2015 = vsel %vm182, %v2005, %v2014
    %v2018 = vadd.f32 %v1904, %v2013
    %v2019 = vadd.f32 %v1905, %v2015
    %s2020 = sld [smem:[#allocation2 + $0x15]]
    %v2021 = vstv %s2020
    %v2022 = vmul.f32 %v2021, %v39
    %v2023 = vmul.f32 %v2021, %v40
    %v2024 = vmul.f32 %v2021, %v41
    %v2025 = vmul.f32 %v2021, %v42
    %v2030 = vrot.slane %v2022, 6
    %v2031 = vrot.slane %v2030, 4
    %v2032 = vrot.slane %v2023, 6
    %v2033 = vrot.slane %v2032, 4
    %v2034 = vrot.slane %v2024, 6
    %v2035 = vrot.slane %v2034, 4
    %v2036 = vrot.slane %v2025, 6
    %v2037 = vrot.slane %v2036, 4
    %2038 = vrot.lane.b32.xlu0 %v2031, 112
    %v2039 = vpop.permute.xlu0 %2038
    %2040 = vrot.lane.b32.xlu0 %v2033, 112
    %v2041 = vpop.permute.xlu0 %2040
    %2042 = vrot.lane.b32.xlu0 %v2035, 112
    %v2043 = vpop.permute.xlu0 %2042
    %2044 = vrot.lane.b32.xlu0 %v2037, 112
    %v2045 = vpop.permute.xlu0 %2044
    %v2046 = vrot.slane %v2039, 4
    %v2047 = vrot.slane %v2041, 4
    %v2048 = vrot.slane %v2043, 4
    %v2049 = vrot.slane %v2045, 4
    %v2050 = vsel %vm89, %v2046, %v2047
    %v2051 = vsel %vm273, %v2039, %v2050
    %v2052 = vsel %vm89, %v2048, %v2049
    %v2053 = vsel %vm273, %v2043, %v2052
    %v2056 = vadd.f32 %v1942, %v2051
    %v2057 = vadd.f32 %v1943, %v2053
    %s2058 = sld [smem:[#allocation2 + $0x30]]
    %v2059 = vstv %s2058
    %v2060 = vmul.f32 %v2059, %v39
    %v2061 = vmul.f32 %v2059, %v40
    %v2062 = vmul.f32 %v2059, %v41
    %v2063 = vmul.f32 %v2059, %v42
    %v2068 = vrot.slane %v2060, 6
    %v2069 = vrot.slane %v2068, 4
    %v2070 = vrot.slane %v2061, 6
    %v2071 = vrot.slane %v2070, 4
    %v2072 = vrot.slane %v2062, 6
    %v2073 = vrot.slane %v2072, 4
    %v2074 = vrot.slane %v2063, 6
    %v2075 = vrot.slane %v2074, 4
    %2076 = vrot.lane.b32.xlu0 %v2069, 112
    %v2077 = vpop.permute.xlu0 %2076
    %2078 = vrot.lane.b32.xlu0 %v2071, 112
    %v2079 = vpop.permute.xlu0 %2078
    %2080 = vrot.lane.b32.xlu0 %v2073, 112
    %v2081 = vpop.permute.xlu0 %2080
    %2082 = vrot.lane.b32.xlu0 %v2075, 112
    %v2083 = vpop.permute.xlu0 %2082
    %v2084 = vrot.slane %v2077, 4
    %v2085 = vrot.slane %v2079, 4
    %v2086 = vrot.slane %v2081, 4
    %v2087 = vrot.slane %v2083, 4
    %v2088 = vsel %vm89, %v2084, %v2085
    %v2089 = vsel %vm273, %v2077, %v2088
    %v2090 = vsel %vm89, %v2086, %v2087
    %v2091 = vsel %vm273, %v2081, %v2090
    %v2094 = vadd.f32 %v1980, %v2089
    %v2095 = vadd.f32 %v1981, %v2091
    %s2096 = sld [smem:[#allocation2 + $0x4b]]
    %v2097 = vstv %s2096
    %v2098 = vmul.f32 %v2097, %v39
    %v2099 = vmul.f32 %v2097, %v40
    %v2100 = vmul.f32 %v2097, %v41
    %v2101 = vmul.f32 %v2097, %v42
    %v2106 = vrot.slane %v2098, 6
    %v2107 = vrot.slane %v2106, 4
    %v2108 = vrot.slane %v2099, 6
    %v2109 = vrot.slane %v2108, 4
    %v2110 = vrot.slane %v2100, 6
    %v2111 = vrot.slane %v2110, 4
    %v2112 = vrot.slane %v2101, 6
    %v2113 = vrot.slane %v2112, 4
    %2114 = vrot.lane.b32.xlu0 %v2107, 112
    %v2115 = vpop.permute.xlu0 %2114
    %2116 = vrot.lane.b32.xlu0 %v2109, 112
    %v2117 = vpop.permute.xlu0 %2116
    %2118 = vrot.lane.b32.xlu0 %v2111, 112
    %v2119 = vpop.permute.xlu0 %2118
    %2120 = vrot.lane.b32.xlu0 %v2113, 112
    %v2121 = vpop.permute.xlu0 %2120
    %v2122 = vrot.slane %v2115, 4
    %v2123 = vrot.slane %v2117, 4
    %v2124 = vrot.slane %v2119, 4
    %v2125 = vrot.slane %v2121, 4
    %v2126 = vsel %vm89, %v2122, %v2123
    %v2127 = vsel %vm273, %v2115, %v2126
    %v2128 = vsel %vm89, %v2124, %v2125
    %v2129 = vsel %vm273, %v2119, %v2128
    %v2132 = vadd.f32 %v2018, %v2127
    %v2133 = vadd.f32 %v2019, %v2129
    %s2134 = sld [smem:[#allocation2 + $0x16]]
    %v2135 = vstv %s2134
    %v2136 = vmul.f32 %v2135, %v39
    %v2137 = vmul.f32 %v2135, %v40
    %v2138 = vmul.f32 %v2135, %v41
    %v2139 = vmul.f32 %v2135, %v42
    %v2144 = vrot.slane %v2136, 6
    %v2145 = vrot.slane %v2144, 4
    %v2146 = vrot.slane %v2137, 6
    %v2147 = vrot.slane %v2146, 4
    %v2148 = vrot.slane %v2138, 6
    %v2149 = vrot.slane %v2148, 4
    %v2150 = vrot.slane %v2139, 6
    %v2151 = vrot.slane %v2150, 4
    %2152 = vrot.lane.b32.xlu0 %v2145, 111
    %v2153 = vpop.permute.xlu0 %2152
    %2154 = vrot.lane.b32.xlu0 %v2147, 111
    %v2155 = vpop.permute.xlu0 %2154
    %2156 = vrot.lane.b32.xlu0 %v2149, 111
    %v2157 = vpop.permute.xlu0 %2156
    %2158 = vrot.lane.b32.xlu0 %v2151, 111
    %v2159 = vpop.permute.xlu0 %2158
    %v2160 = vrot.slane %v2153, 4
    %v2161 = vrot.slane %v2155, 4
    %v2162 = vrot.slane %v2157, 4
    %v2163 = vrot.slane %v2159, 4
    %v2164 = vsel %vm89, %v2160, %v2161
    %v2165 = vsel %vm364, %v2153, %v2164
    %v2166 = vsel %vm89, %v2162, %v2163
    %v2167 = vsel %vm364, %v2157, %v2166
    %v2170 = vadd.f32 %v2056, %v2165
    %v2171 = vadd.f32 %v2057, %v2167
    %s2172 = sld [smem:[#allocation2 + $0x31]]
    %v2173 = vstv %s2172
    %v2174 = vmul.f32 %v2173, %v39
    %v2175 = vmul.f32 %v2173, %v40
    %v2176 = vmul.f32 %v2173, %v41
    %v2177 = vmul.f32 %v2173, %v42
    %v2182 = vrot.slane %v2174, 6
    %v2183 = vrot.slane %v2182, 4
    %v2184 = vrot.slane %v2175, 6
    %v2185 = vrot.slane %v2184, 4
    %v2186 = vrot.slane %v2176, 6
    %v2187 = vrot.slane %v2186, 4
    %v2188 = vrot.slane %v2177, 6
    %v2189 = vrot.slane %v2188, 4
    %2190 = vrot.lane.b32.xlu0 %v2183, 111
    %v2191 = vpop.permute.xlu0 %2190
    %2192 = vrot.lane.b32.xlu0 %v2185, 111
    %v2193 = vpop.permute.xlu0 %2192
    %2194 = vrot.lane.b32.xlu0 %v2187, 111
    %v2195 = vpop.permute.xlu0 %2194
    %2196 = vrot.lane.b32.xlu0 %v2189, 111
    %v2197 = vpop.permute.xlu0 %2196
    %v2198 = vrot.slane %v2191, 4
    %v2199 = vrot.slane %v2193, 4
    %v2200 = vrot.slane %v2195, 4
    %v2201 = vrot.slane %v2197, 4
    %v2202 = vsel %vm89, %v2198, %v2199
    %v2203 = vsel %vm364, %v2191, %v2202
    %v2204 = vsel %vm89, %v2200, %v2201
    %v2205 = vsel %vm364, %v2195, %v2204
    %v2208 = vadd.f32 %v2094, %v2203
    %v2209 = vadd.f32 %v2095, %v2205
    %s2210 = sld [smem:[#allocation2 + $0x4c]]
    %v2211 = vstv %s2210
    %v2212 = vmul.f32 %v2211, %v39
    %v2213 = vmul.f32 %v2211, %v40
    %v2214 = vmul.f32 %v2211, %v41
    %v2215 = vmul.f32 %v2211, %v42
    %v2220 = vrot.slane %v2212, 6
    %v2221 = vrot.slane %v2220, 4
    %v2222 = vrot.slane %v2213, 6
    %v2223 = vrot.slane %v2222, 4
    %v2224 = vrot.slane %v2214, 6
    %v2225 = vrot.slane %v2224, 4
    %v2226 = vrot.slane %v2215, 6
    %v2227 = vrot.slane %v2226, 4
    %2228 = vrot.lane.b32.xlu0 %v2221, 111
    %v2229 = vpop.permute.xlu0 %2228
    %2230 = vrot.lane.b32.xlu0 %v2223, 111
    %v2231 = vpop.permute.xlu0 %2230
    %2232 = vrot.lane.b32.xlu0 %v2225, 111
    %v2233 = vpop.permute.xlu0 %2232
    %2234 = vrot.lane.b32.xlu0 %v2227, 111
    %v2235 = vpop.permute.xlu0 %2234
    %v2236 = vrot.slane %v2229, 4
    %v2237 = vrot.slane %v2231, 4
    %v2238 = vrot.slane %v2233, 4
    %v2239 = vrot.slane %v2235, 4
    %v2240 = vsel %vm89, %v2236, %v2237
    %v2241 = vsel %vm364, %v2229, %v2240
    %v2242 = vsel %vm89, %v2238, %v2239
    %v2243 = vsel %vm364, %v2233, %v2242
    %v2246 = vadd.f32 %v2132, %v2241
    %v2247 = vadd.f32 %v2133, %v2243
    %s2248 = sld [smem:[#allocation2 + $0x17]]
    %v2249 = vstv %s2248
    %v2250 = vmul.f32 %v2249, %v39
    %v2251 = vmul.f32 %v2249, %v40
    %v2252 = vmul.f32 %v2249, %v41
    %v2253 = vmul.f32 %v2249, %v42
    %v2258 = vrot.slane %v2250, 6
    %v2259 = vrot.slane %v2258, 4
    %v2260 = vrot.slane %v2251, 6
    %v2261 = vrot.slane %v2260, 4
    %v2262 = vrot.slane %v2252, 6
    %v2263 = vrot.slane %v2262, 4
    %v2264 = vrot.slane %v2253, 6
    %v2265 = vrot.slane %v2264, 4
    %2266 = vrot.lane.b32.xlu0 %v2259, 110
    %v2267 = vpop.permute.xlu0 %2266
    %2268 = vrot.lane.b32.xlu0 %v2261, 110
    %v2269 = vpop.permute.xlu0 %2268
    %2270 = vrot.lane.b32.xlu0 %v2263, 110
    %v2271 = vpop.permute.xlu0 %2270
    %2272 = vrot.lane.b32.xlu0 %v2265, 110
    %v2273 = vpop.permute.xlu0 %2272
    %v2274 = vrot.slane %v2267, 4
    %v2275 = vrot.slane %v2269, 4
    %v2276 = vrot.slane %v2271, 4
    %v2277 = vrot.slane %v2273, 4
    %v2278 = vsel %vm89, %v2274, %v2275
    %v2279 = vsel %vm455, %v2267, %v2278
    %v2280 = vsel %vm89, %v2276, %v2277
    %v2281 = vsel %vm455, %v2271, %v2280
    %v2284 = vadd.f32 %v2170, %v2279
    %v2285 = vadd.f32 %v2171, %v2281
    %s2286 = sld [smem:[#allocation2 + $0x32]]
    %v2287 = vstv %s2286
    %v2288 = vmul.f32 %v2287, %v39
    %v2289 = vmul.f32 %v2287, %v40
    %v2290 = vmul.f32 %v2287, %v41
    %v2291 = vmul.f32 %v2287, %v42
    %v2296 = vrot.slane %v2288, 6
    %v2297 = vrot.slane %v2296, 4
    %v2298 = vrot.slane %v2289, 6
    %v2299 = vrot.slane %v2298, 4
    %v2300 = vrot.slane %v2290, 6
    %v2301 = vrot.slane %v2300, 4
    %v2302 = vrot.slane %v2291, 6
    %v2303 = vrot.slane %v2302, 4
    %2304 = vrot.lane.b32.xlu0 %v2297, 110
    %v2305 = vpop.permute.xlu0 %2304
    %2306 = vrot.lane.b32.xlu0 %v2299, 110
    %v2307 = vpop.permute.xlu0 %2306
    %2308 = vrot.lane.b32.xlu0 %v2301, 110
    %v2309 = vpop.permute.xlu0 %2308
    %2310 = vrot.lane.b32.xlu0 %v2303, 110
    %v2311 = vpop.permute.xlu0 %2310
    %v2312 = vrot.slane %v2305, 4
    %v2313 = vrot.slane %v2307, 4
    %v2314 = vrot.slane %v2309, 4
    %v2315 = vrot.slane %v2311, 4
    %v2316 = vsel %vm89, %v2312, %v2313
    %v2317 = vsel %vm455, %v2305, %v2316
    %v2318 = vsel %vm89, %v2314, %v2315
    %v2319 = vsel %vm455, %v2309, %v2318
    %v2322 = vadd.f32 %v2208, %v2317
    %v2323 = vadd.f32 %v2209, %v2319
    %s2324 = sld [smem:[#allocation2 + $0x4d]]
    %v2325 = vstv %s2324
    %v2326 = vmul.f32 %v2325, %v39
    %v2327 = vmul.f32 %v2325, %v40
    %v2328 = vmul.f32 %v2325, %v41
    %v2329 = vmul.f32 %v2325, %v42
    %v2334 = vrot.slane %v2326, 6
    %v2335 = vrot.slane %v2334, 4
    %v2336 = vrot.slane %v2327, 6
    %v2337 = vrot.slane %v2336, 4
    %v2338 = vrot.slane %v2328, 6
    %v2339 = vrot.slane %v2338, 4
    %v2340 = vrot.slane %v2329, 6
    %v2341 = vrot.slane %v2340, 4
    %2342 = vrot.lane.b32.xlu0 %v2335, 110
    %v2343 = vpop.permute.xlu0 %2342
    %2344 = vrot.lane.b32.xlu0 %v2337, 110
    %v2345 = vpop.permute.xlu0 %2344
    %2346 = vrot.lane.b32.xlu0 %v2339, 110
    %v2347 = vpop.permute.xlu0 %2346
    %2348 = vrot.lane.b32.xlu0 %v2341, 110
    %v2349 = vpop.permute.xlu0 %2348
    %v2350 = vrot.slane %v2343, 4
    %v2351 = vrot.slane %v2345, 4
    %v2352 = vrot.slane %v2347, 4
    %v2353 = vrot.slane %v2349, 4
    %v2354 = vsel %vm89, %v2350, %v2351
    %v2355 = vsel %vm455, %v2343, %v2354
    %v2356 = vsel %vm89, %v2352, %v2353
    %v2357 = vsel %vm455, %v2347, %v2356
    %v2360 = vadd.f32 %v2246, %v2355
    %v2361 = vadd.f32 %v2247, %v2357
    %s2362 = sld [smem:[#allocation2 + $0x18]]
    %v2363 = vstv %s2362
    %v2364 = vmul.f32 %v2363, %v39
    %v2365 = vmul.f32 %v2363, %v40
    %v2366 = vmul.f32 %v2363, %v41
    %v2367 = vmul.f32 %v2363, %v42
    %v2372 = vrot.slane %v2364, 6
    %v2373 = vrot.slane %v2372, 4
    %v2374 = vrot.slane %v2365, 6
    %v2375 = vrot.slane %v2374, 4
    %v2376 = vrot.slane %v2366, 6
    %v2377 = vrot.slane %v2376, 4
    %v2378 = vrot.slane %v2367, 6
    %v2379 = vrot.slane %v2378, 4
    %2380 = vrot.lane.b32.xlu0 %v2373, 96
    %v2381 = vpop.permute.xlu0 %2380
    %2382 = vrot.lane.b32.xlu0 %v2375, 96
    %v2383 = vpop.permute.xlu0 %2382
    %2384 = vrot.lane.b32.xlu0 %v2377, 96
    %v2385 = vpop.permute.xlu0 %2384
    %2386 = vrot.lane.b32.xlu0 %v2379, 96
    %v2387 = vpop.permute.xlu0 %2386
    %v2388 = vrot.slane %v2381, 4
    %v2389 = vrot.slane %v2383, 4
    %v2390 = vrot.slane %v2385, 4
    %v2391 = vrot.slane %v2387, 4
    %v2392 = vsel %vm89, %v2388, %v2389
    %v2393 = vsel %vm546, %v2381, %v2392
    %v2394 = vsel %vm89, %v2390, %v2391
    %v2395 = vsel %vm546, %v2385, %v2394
    %v2398 = vadd.f32 %v2284, %v2393
    %v2399 = vadd.f32 %v2285, %v2395
    %s2400 = sld [smem:[#allocation2 + $0x33]]
    %v2401 = vstv %s2400
    %v2402 = vmul.f32 %v2401, %v39
    %v2403 = vmul.f32 %v2401, %v40
    %v2404 = vmul.f32 %v2401, %v41
    %v2405 = vmul.f32 %v2401, %v42
    %v2410 = vrot.slane %v2402, 6
    %v2411 = vrot.slane %v2410, 4
    %v2412 = vrot.slane %v2403, 6
    %v2413 = vrot.slane %v2412, 4
    %v2414 = vrot.slane %v2404, 6
    %v2415 = vrot.slane %v2414, 4
    %v2416 = vrot.slane %v2405, 6
    %v2417 = vrot.slane %v2416, 4
    %2418 = vrot.lane.b32.xlu0 %v2411, 96
    %v2419 = vpop.permute.xlu0 %2418
    %2420 = vrot.lane.b32.xlu0 %v2413, 96
    %v2421 = vpop.permute.xlu0 %2420
    %2422 = vrot.lane.b32.xlu0 %v2415, 96
    %v2423 = vpop.permute.xlu0 %2422
    %2424 = vrot.lane.b32.xlu0 %v2417, 96
    %v2425 = vpop.permute.xlu0 %2424
    %v2426 = vrot.slane %v2419, 4
    %v2427 = vrot.slane %v2421, 4
    %v2428 = vrot.slane %v2423, 4
    %v2429 = vrot.slane %v2425, 4
    %v2430 = vsel %vm89, %v2426, %v2427
    %v2431 = vsel %vm546, %v2419, %v2430
    %v2432 = vsel %vm89, %v2428, %v2429
    %v2433 = vsel %vm546, %v2423, %v2432
    %v2436 = vadd.f32 %v2322, %v2431
    %v2437 = vadd.f32 %v2323, %v2433
    %s2438 = sld [smem:[#allocation2 + $0x4e]]
    %v2439 = vstv %s2438
    %v2440 = vmul.f32 %v2439, %v39
    %v2441 = vmul.f32 %v2439, %v40
    %v2442 = vmul.f32 %v2439, %v41
    %v2443 = vmul.f32 %v2439, %v42
    %v2448 = vrot.slane %v2440, 6
    %v2449 = vrot.slane %v2448, 4
    %v2450 = vrot.slane %v2441, 6
    %v2451 = vrot.slane %v2450, 4
    %v2452 = vrot.slane %v2442, 6
    %v2453 = vrot.slane %v2452, 4
    %v2454 = vrot.slane %v2443, 6
    %v2455 = vrot.slane %v2454, 4
    %2456 = vrot.lane.b32.xlu0 %v2449, 96
    %v2457 = vpop.permute.xlu0 %2456
    %2458 = vrot.lane.b32.xlu0 %v2451, 96
    %v2459 = vpop.permute.xlu0 %2458
    %2460 = vrot.lane.b32.xlu0 %v2453, 96
    %v2461 = vpop.permute.xlu0 %2460
    %2462 = vrot.lane.b32.xlu0 %v2455, 96
    %v2463 = vpop.permute.xlu0 %2462
    %v2464 = vrot.slane %v2457, 4
    %v2465 = vrot.slane %v2459, 4
    %v2466 = vrot.slane %v2461, 4
    %v2467 = vrot.slane %v2463, 4
    %v2468 = vsel %vm89, %v2464, %v2465
    %v2469 = vsel %vm546, %v2457, %v2468
    %v2470 = vsel %vm89, %v2466, %v2467
    %v2471 = vsel %vm546, %v2461, %v2470
    %v2474 = vadd.f32 %v2360, %v2469
    %v2475 = vadd.f32 %v2361, %v2471
    %s2476 = sld [smem:[#allocation2 + $0x19]]
    %v2477 = vstv %s2476
    %v2478 = vmul.f32 %v2477, %v39
    %v2479 = vmul.f32 %v2477, %v40
    %v2480 = vmul.f32 %v2477, %v41
    %v2481 = vmul.f32 %v2477, %v42
    %v2486 = vrot.slane %v2478, 6
    %v2487 = vrot.slane %v2486, 4
    %v2488 = vrot.slane %v2479, 6
    %v2489 = vrot.slane %v2488, 4
    %v2490 = vrot.slane %v2480, 6
    %v2491 = vrot.slane %v2490, 4
    %v2492 = vrot.slane %v2481, 6
    %v2493 = vrot.slane %v2492, 4
    %2494 = vrot.lane.b32.xlu0 %v2487, 95
    %v2495 = vpop.permute.xlu0 %2494
    %2496 = vrot.lane.b32.xlu0 %v2489, 95
    %v2497 = vpop.permute.xlu0 %2496
    %2498 = vrot.lane.b32.xlu0 %v2491, 95
    %v2499 = vpop.permute.xlu0 %2498
    %2500 = vrot.lane.b32.xlu0 %v2493, 95
    %v2501 = vpop.permute.xlu0 %2500
    %v2502 = vrot.slane %v2495, 4
    %v2503 = vrot.slane %v2497, 4
    %v2504 = vrot.slane %v2499, 4
    %v2505 = vrot.slane %v2501, 4
    %v2506 = vsel %vm89, %v2502, %v2503
    %v2507 = vsel %vm637, %v2495, %v2506
    %v2508 = vsel %vm89, %v2504, %v2505
    %v2509 = vsel %vm637, %v2499, %v2508
    %v2512 = vadd.f32 %v2398, %v2507
    %v2513 = vadd.f32 %v2399, %v2509
    %s2514 = sld [smem:[#allocation2 + $0x34]]
    %v2515 = vstv %s2514
    %v2516 = vmul.f32 %v2515, %v39
    %v2517 = vmul.f32 %v2515, %v40
    %v2518 = vmul.f32 %v2515, %v41
    %v2519 = vmul.f32 %v2515, %v42
    %v2524 = vrot.slane %v2516, 6
    %v2525 = vrot.slane %v2524, 4
    %v2526 = vrot.slane %v2517, 6
    %v2527 = vrot.slane %v2526, 4
    %v2528 = vrot.slane %v2518, 6
    %v2529 = vrot.slane %v2528, 4
    %v2530 = vrot.slane %v2519, 6
    %v2531 = vrot.slane %v2530, 4
    %2532 = vrot.lane.b32.xlu0 %v2525, 95
    %v2533 = vpop.permute.xlu0 %2532
    %2534 = vrot.lane.b32.xlu0 %v2527, 95
    %v2535 = vpop.permute.xlu0 %2534
    %2536 = vrot.lane.b32.xlu0 %v2529, 95
    %v2537 = vpop.permute.xlu0 %2536
    %2538 = vrot.lane.b32.xlu0 %v2531, 95
    %v2539 = vpop.permute.xlu0 %2538
    %v2540 = vrot.slane %v2533, 4
    %v2541 = vrot.slane %v2535, 4
    %v2542 = vrot.slane %v2537, 4
    %v2543 = vrot.slane %v2539, 4
    %v2544 = vsel %vm89, %v2540, %v2541
    %v2545 = vsel %vm637, %v2533, %v2544
    %v2546 = vsel %vm89, %v2542, %v2543
    %v2547 = vsel %vm637, %v2537, %v2546
    %v2550 = vadd.f32 %v2436, %v2545
    %v2551 = vadd.f32 %v2437, %v2547
    %s2552 = sld [smem:[#allocation2 + $0x4f]]
    %v2553 = vstv %s2552
    %v2554 = vmul.f32 %v2553, %v39
    %v2555 = vmul.f32 %v2553, %v40
    %v2556 = vmul.f32 %v2553, %v41
    %v2557 = vmul.f32 %v2553, %v42
    %v2562 = vrot.slane %v2554, 6
    %v2563 = vrot.slane %v2562, 4
    %v2564 = vrot.slane %v2555, 6
    %v2565 = vrot.slane %v2564, 4
    %v2566 = vrot.slane %v2556, 6
    %v2567 = vrot.slane %v2566, 4
    %v2568 = vrot.slane %v2557, 6
    %v2569 = vrot.slane %v2568, 4
    %2570 = vrot.lane.b32.xlu0 %v2563, 95
    %v2571 = vpop.permute.xlu0 %2570
    %2572 = vrot.lane.b32.xlu0 %v2565, 95
    %v2573 = vpop.permute.xlu0 %2572
    %2574 = vrot.lane.b32.xlu0 %v2567, 95
    %v2575 = vpop.permute.xlu0 %2574
    %2576 = vrot.lane.b32.xlu0 %v2569, 95
    %v2577 = vpop.permute.xlu0 %2576
    %v2578 = vrot.slane %v2571, 4
    %v2579 = vrot.slane %v2573, 4
    %v2580 = vrot.slane %v2575, 4
    %v2581 = vrot.slane %v2577, 4
    %v2582 = vsel %vm89, %v2578, %v2579
    %v2583 = vsel %vm637, %v2571, %v2582
    %v2584 = vsel %vm89, %v2580, %v2581
    %v2585 = vsel %vm637, %v2575, %v2584
    %v2588 = vadd.f32 %v2474, %v2583
    %v2589 = vadd.f32 %v2475, %v2585
    %s2590 = sld [smem:[#allocation2 + $0x1a]]
    %v2591 = vstv %s2590
    %v2592 = vmul.f32 %v2591, %v39
    %v2593 = vmul.f32 %v2591, %v40
    %v2594 = vmul.f32 %v2591, %v41
    %v2595 = vmul.f32 %v2591, %v42
    %v2600 = vrot.slane %v2592, 6
    %v2601 = vrot.slane %v2600, 4
    %v2602 = vrot.slane %v2593, 6
    %v2603 = vrot.slane %v2602, 4
    %v2604 = vrot.slane %v2594, 6
    %v2605 = vrot.slane %v2604, 4
    %v2606 = vrot.slane %v2595, 6
    %v2607 = vrot.slane %v2606, 4
    %2608 = vrot.lane.b32.xlu0 %v2601, 94
    %v2609 = vpop.permute.xlu0 %2608
    %2610 = vrot.lane.b32.xlu0 %v2603, 94
    %v2611 = vpop.permute.xlu0 %2610
    %2612 = vrot.lane.b32.xlu0 %v2605, 94
    %v2613 = vpop.permute.xlu0 %2612
    %2614 = vrot.lane.b32.xlu0 %v2607, 94
    %v2615 = vpop.permute.xlu0 %2614
    %v2616 = vrot.slane %v2609, 4
    %v2617 = vrot.slane %v2611, 4
    %v2618 = vrot.slane %v2613, 4
    %v2619 = vrot.slane %v2615, 4
    %v2620 = vsel %vm89, %v2616, %v2617
    %v2621 = vsel %vm728, %v2609, %v2620
    %v2622 = vsel %vm89, %v2618, %v2619
    %v2623 = vsel %vm728, %v2613, %v2622
    %v2626 = vadd.f32 %v2512, %v2621
    %v2627 = vadd.f32 %v2513, %v2623
    %s2628 = sld [smem:[#allocation2 + $0x35]]
    %v2629 = vstv %s2628
    %v2630 = vmul.f32 %v2629, %v39
    %v2631 = vmul.f32 %v2629, %v40
    %v2632 = vmul.f32 %v2629, %v41
    %v2633 = vmul.f32 %v2629, %v42
    %v2638 = vrot.slane %v2630, 6
    %v2639 = vrot.slane %v2638, 4
    %v2640 = vrot.slane %v2631, 6
    %v2641 = vrot.slane %v2640, 4
    %v2642 = vrot.slane %v2632, 6
    %v2643 = vrot.slane %v2642, 4
    %v2644 = vrot.slane %v2633, 6
    %v2645 = vrot.slane %v2644, 4
    %2646 = vrot.lane.b32.xlu0 %v2639, 94
    %v2647 = vpop.permute.xlu0 %2646
    %2648 = vrot.lane.b32.xlu0 %v2641, 94
    %v2649 = vpop.permute.xlu0 %2648
    %2650 = vrot.lane.b32.xlu0 %v2643, 94
    %v2651 = vpop.permute.xlu0 %2650
    %2652 = vrot.lane.b32.xlu0 %v2645, 94
    %v2653 = vpop.permute.xlu0 %2652
    %v2654 = vrot.slane %v2647, 4
    %v2655 = vrot.slane %v2649, 4
    %v2656 = vrot.slane %v2651, 4
    %v2657 = vrot.slane %v2653, 4
    %v2658 = vsel %vm89, %v2654, %v2655
    %v2659 = vsel %vm728, %v2647, %v2658
    %v2660 = vsel %vm89, %v2656, %v2657
    %v2661 = vsel %vm728, %v2651, %v2660
    %v2664 = vadd.f32 %v2550, %v2659
    %v2665 = vadd.f32 %v2551, %v2661
    %s2666 = sld [smem:[#allocation2 + $0x50]]
    %v2667 = vstv %s2666
    %v2668 = vmul.f32 %v2667, %v39
    %v2669 = vmul.f32 %v2667, %v40
    %v2670 = vmul.f32 %v2667, %v41
    %v2671 = vmul.f32 %v2667, %v42
    %v2676 = vrot.slane %v2668, 6
    %v2677 = vrot.slane %v2676, 4
    %v2678 = vrot.slane %v2669, 6
    %v2679 = vrot.slane %v2678, 4
    %v2680 = vrot.slane %v2670, 6
    %v2681 = vrot.slane %v2680, 4
    %v2682 = vrot.slane %v2671, 6
    %v2683 = vrot.slane %v2682, 4
    %2684 = vrot.lane.b32.xlu0 %v2677, 94
    %v2685 = vpop.permute.xlu0 %2684
    %2686 = vrot.lane.b32.xlu0 %v2679, 94
    %v2687 = vpop.permute.xlu0 %2686
    %2688 = vrot.lane.b32.xlu0 %v2681, 94
    %v2689 = vpop.permute.xlu0 %2688
    %2690 = vrot.lane.b32.xlu0 %v2683, 94
    %v2691 = vpop.permute.xlu0 %2690
    %v2692 = vrot.slane %v2685, 4
    %v2693 = vrot.slane %v2687, 4
    %v2694 = vrot.slane %v2689, 4
    %v2695 = vrot.slane %v2691, 4
    %v2696 = vsel %vm89, %v2692, %v2693
    %v2697 = vsel %vm728, %v2685, %v2696
    %v2698 = vsel %vm89, %v2694, %v2695
    %v2699 = vsel %vm728, %v2689, %v2698
    %v2702 = vadd.f32 %v2588, %v2697
    %v2703 = vadd.f32 %v2589, %v2699
    %v2706 = vlaneseq
    %v2707 = vshrl.u32 %v2706, 7
    %v2708 = vsub.s32 0, %v2707
    %v2709 = vrot.slane %v2626, %v2708
    %v2710 = vlaneseq
    %v2711 = vshrl.u32 %v2710, 7
    %v2712 = vsub.s32 4, %v2711
    %v2713 = vrot.slane %v2626, %v2712
    %v2714 = vlaneseq
    %v2715 = vshrl.u32 %v2714, 7
    %v2716 = vsub.s32 0, %v2715
    %v2717 = vrot.slane %v2627, %v2716
    %v2718 = vlaneseq
    %v2719 = vshrl.u32 %v2718, 7
    %v2720 = vsub.s32 4, %v2719
    %v2721 = vrot.slane %v2627, %v2720
    %v2728 = vlaneseq
    %v2729 = vshrl.u32 %v2728, 7
    %v2730 = vsub.s32 0, %v2729
    %v2731 = vrot.slane %v2664, %v2730
    %v2732 = vlaneseq
    %v2733 = vshrl.u32 %v2732, 7
    %v2734 = vsub.s32 4, %v2733
    %v2735 = vrot.slane %v2664, %v2734
    %v2736 = vlaneseq
    %v2737 = vshrl.u32 %v2736, 7
    %v2738 = vsub.s32 0, %v2737
    %v2739 = vrot.slane %v2665, %v2738
    %v2740 = vlaneseq
    %v2741 = vshrl.u32 %v2740, 7
    %v2742 = vsub.s32 4, %v2741
    %v2743 = vrot.slane %v2665, %v2742
    %v2750 = vlaneseq
    %v2751 = vshrl.u32 %v2750, 7
    %v2752 = vsub.s32 0, %v2751
    %v2753 = vrot.slane %v2702, %v2752
    %v2754 = vlaneseq
    %v2755 = vshrl.u32 %v2754, 7
    %v2756 = vsub.s32 4, %v2755
    %v2757 = vrot.slane %v2702, %v2756
    %v2758 = vlaneseq
    %v2759 = vshrl.u32 %v2758, 7
    %v2760 = vsub.s32 0, %v2759
    %v2761 = vrot.slane %v2703, %v2760
    %v2762 = vlaneseq
    %v2763 = vshrl.u32 %v2762, 7
    %v2764 = vsub.s32 4, %v2763
    %v2765 = vrot.slane %v2703, %v2764
    %vm2770 = vcmask 1040384
    %v2771 = vsel %vm2770, %v2709, %v2731
    %v2772 = vsel %vm2770, %v2713, %v2735
    %v2773 = vsel %vm2770, %v2717, %v2739
    %v2774 = vsel %vm2770, %v2721, %v2743
    %vm2775 = vcmask 1041408
    %v2776 = vsel %vm2775, %v2771, %v2753
    %v2777 = vsel %vm2775, %v2772, %v2757
    %v2778 = vsel %vm2775, %v2773, %v2761
    %v2779 = vsel %vm2775, %v2774, %v2765
    %v2784 = vcombine.low %v2776, %v2777
    %v2785 = vcombine.low %v2778, %v2779
    %2788 = vst [vmem:[%s3] sm:$0x77] %v2784
    %2789 = vst [vmem:[%s3 + $0x8] sm:$0x77] %v2785
    // Predicated region
    $region22: #{conv2d_pallas.1} parent=1 // pred_check
      _
    $region23: #{conv2d_pallas.1} parent=1 // pred_check_branch
      %2791 = sbr.rel (0) target = $region25
    $region24: #{conv2d_pallas.1} parent=1 // pred_region
      _
    $region25: #{conv2d_pallas.1} parent=1 // pred_fallthru
      _
    // Predicated region
    $region26: #{conv2d_pallas.1} parent=1 // pred_check
      _
    $region27: #{conv2d_pallas.1} parent=1 // pred_check_branch
      %2793 = sbr.rel (0) target = $region29
    $region28: #{conv2d_pallas.1} parent=1 // pred_region
      _
    $region29: #{conv2d_pallas.1} parent=1 // pred_fallthru
      _
    %2794 = vsyncpa [#allocation3], 1
    %2795 = vsyncpa [#allocation5], 1

</llo_original>
